<compile_context>
chip_gen: v6e
topology: v6e:2x2x1
jax: 0.10.0
libtpu: 0.0.40
codegen_flags: <defaults>
</compile_context>

<pallas_src>
import functools

import jax
import jax.numpy as jnp
from jax.experimental import pallas as pl
from jax.experimental.pallas import tpu as pltpu


def _down_unit_kernel(x_ref, wdw_ref, wr1_ref, br1_ref, wcat_ref, bcat_ref,
                      out_ref, *, Hh, Wh, Ho, Wo, Cin):
    f32 = jnp.float32
    x = x_ref[...].astype(f32)                     # (4, Hh, Wh, Cin) parity planes

    # ---- right-branch head: 1x1 conv (BN folded in) + ReLU, all 4 planes at once (MXU)
    wr1 = wr1_ref[...].astype(f32)                 # (Cin, Cin)
    br1 = br1_ref[...].astype(f32)                 # (1, Cin)
    r = jnp.dot(x.reshape(4 * Hh * Wh, Cin), wr1,
                preferred_element_type=f32) + br1
    r = jnp.maximum(r, 0.0).reshape(4, Hh, Wh, Cin)

    def tap(planes, kh, kw):
        # input pixels at (2*i + kh, 2*j + kw) for i < Ho, j < Wo
        p = (kh % 2) * 2 + (kw % 2)
        h0, w0 = kh // 2, kw // 2
        return planes[p, h0:h0 + Ho, w0:w0 + Wo, :]

    def dwconv3x3_s2(planes, w):
        # depthwise 3x3, stride 2, no padding -> (Ho, Wo, Cin); BN scale folded into w
        acc = tap(planes, 0, 0) * w[0, 0]
        for kh in range(3):
            for kw in range(3):
                if kh == 0 and kw == 0:
                    continue
                acc = acc + tap(planes, kh, kw) * w[kh, kw]
        return acc

    wdw = wdw_ref[...].astype(f32)                 # (2, 3, 3, Cin): [left, right]
    yl = dwconv3x3_s2(x, wdw[0]).reshape(Ho * Wo, Cin)
    yr = dwconv3x3_s2(r, wdw[1]).reshape(Ho * Wo, Cin)

    # ---- tail 1x1 convs of both branches + concat + channel shuffle, fused:
    # wcat columns are already in the post-shuffle output-channel order.
    wcat = wcat_ref[...].astype(f32)               # (2*Cin, Cout)
    bcat = bcat_ref[...].astype(f32)               # (1, Cout)
    out = (jnp.dot(yl, wcat[:Cin, :], preferred_element_type=f32)
           + jnp.dot(yr, wcat[Cin:, :], preferred_element_type=f32)
           + bcat)
    out_ref[0] = jnp.maximum(out, 0.0).astype(out_ref.dtype)


def init_params(key, in_ch, out_ch):
    """Deterministic synthetic parameters (xavier-normal convs, default BN)."""
    c2 = out_ch // 2
    ks = jax.random.split(key, 5)
    eps = 1e-5

    def xavier(k, shape, fan_in, fan_out):
        std = (2.0 / (fan_in + fan_out)) ** 0.5
        return std * jax.random.normal(k, shape, jnp.float32)

    def bn_scale_bias(c):
        gamma = jnp.ones((1, c), jnp.float32)
        beta = jnp.zeros((1, c), jnp.float32)
        mean = jnp.zeros((1, c), jnp.float32)
        var = jnp.ones((1, c), jnp.float32)
        s = gamma / jnp.sqrt(var + eps)
        return s, beta - mean * s

    params = {
        'wdwl': xavier(ks[0], (3, 3, in_ch), 9, 9),           # left depthwise 3x3
        'wl':   xavier(ks[1], (in_ch, c2), in_ch, c2),        # left 1x1
        'wr1':  xavier(ks[2], (in_ch, in_ch), in_ch, in_ch),  # right 1x1 (head)
        'wdwr': xavier(ks[3], (3, 3, in_ch), 9, 9),           # right depthwise 3x3
        'wr2':  xavier(ks[4], (in_ch, c2), in_ch, c2),        # right 1x1 (tail)
    }
    params['sl1'], params['bl1'] = bn_scale_bias(in_ch)
    params['sl2'], params['bl2'] = bn_scale_bias(c2)
    params['sr1'], params['br1'] = bn_scale_bias(in_ch)
    params['sr2'], params['br2'] = bn_scale_bias(in_ch)
    params['sr3'], params['br3'] = bn_scale_bias(c2)
    return params


def _fold_params(params, groups):
    """Fold eval-mode BN into conv weights; fuse both tail 1x1 convs, the
    channel concat and the groups channel-shuffle into one weight/bias."""
    cin = params['wdwl'].shape[-1]
    c2 = params['wl'].shape[-1]
    cout = 2 * c2

    sl1, bl1 = params['sl1'][0], params['bl1'][0]
    sl2, bl2 = params['sl2'][0], params['bl2'][0]
    sr1, br1 = params['sr1'][0], params['br1'][0]
    sr2, br2 = params['sr2'][0], params['br2'][0]
    sr3, br3 = params['sr3'][0], params['br3'][0]

    # left:  relu( dw(x, wdwl*sl1) @ (wl*sl2) + ((bl1 @ wl)*sl2 + bl2) )
    wdwl_f = params['wdwl'] * sl1
    wl_f = params['wl'] * sl2[None, :]
    bias_l = (bl1 @ params['wl']) * sl2 + bl2

    # right head: relu( x @ (wr1*sr1) + br1 )
    wr1_f = params['wr1'] * sr1[None, :]
    br1_f = br1[None, :]

    # right tail: relu( dw(r, wdwr*sr2) @ (wr2*sr3) + ((br2 @ wr2)*sr3 + br3) )
    wdwr_f = params['wdwr'] * sr2
    wr2_f = params['wr2'] * sr3[None, :]
    bias_r = (br2 @ params['wr2']) * sr3 + br3

    w_dw = jnp.stack([wdwl_f, wdwr_f], axis=0)             # (2, 3, 3, Cin)

    zeros = jnp.zeros((cin, c2), jnp.float32)
    w_cat = jnp.concatenate(
        [jnp.concatenate([wl_f, zeros], axis=1),           # left dw feats -> left half
         jnp.concatenate([zeros, wr2_f], axis=1)],         # right dw feats -> right half
        axis=0)                                            # (2*Cin, Cout), concat order
    b_cat = jnp.concatenate([bias_l, bias_r])              # (Cout,)

    # fold channel_shuffle(groups): new channel j*g + gi <- old gi*(C//g) + j
    perm = jnp.arange(cout).reshape(groups, cout // groups).T.reshape(-1)
    w_cat = w_cat[:, perm]
    b_cat = b_cat[perm][None, :]
    return w_dw, wr1_f, br1_f, w_cat, b_cat


def _full_spec(a):
    nd = a.ndim
    return pl.BlockSpec(a.shape, lambda n, nd=nd: (0,) * nd)


def down_unit_forward(x_nchw, params, groups=2):
    N, Cin, H, W = x_nchw.shape
    assert H % 2 == 0 and W % 2 == 0 and H >= 4 and W >= 4
    Hh, Wh = H // 2, W // 2
    Ho, Wo = (H - 3) // 2 + 1, (W - 3) // 2 + 1
    C2 = params['wl'].shape[1]
    Cout = 2 * C2

    w_dw, w_r1, b_r1, w_cat, b_cat = _fold_params(params, groups)

    # NCHW -> NHWC, split into 4 (row,col) parity planes, stacked parity-major
    x = jnp.transpose(x_nchw, (0, 2, 3, 1)).astype(jnp.float32)
    parts = jnp.stack([x[:, hp::2, wp::2, :] for hp in (0, 1) for wp in (0, 1)],
                      axis=1)                              # (N, 4, Hh, Wh, Cin)
    x_stack = parts.reshape(N * 4, Hh, Wh, Cin)

    kern = functools.partial(_down_unit_kernel,
                             Hh=Hh, Wh=Wh, Ho=Ho, Wo=Wo, Cin=Cin)
    out2d = pl.pallas_call(
        kern,
        out_shape=jax.ShapeDtypeStruct((N, Ho * Wo, Cout), jnp.float32),
        grid=(N,),
        in_specs=[pl.BlockSpec((4, Hh, Wh, Cin), lambda n: (n, 0, 0, 0))]
                 + [_full_spec(a) for a in (w_dw, w_r1, b_r1, w_cat, b_cat)],
        out_specs=pl.BlockSpec((1, Ho * Wo, Cout), lambda n: (n, 0, 0)),
        compiler_params=pltpu.CompilerParams(
            dimension_semantics=("parallel",)),
    )(x_stack, w_dw, w_r1, b_r1, w_cat, b_cat)

    # channel shuffle is already folded into w_cat's columns; just go back to NCHW
    out_nhwc = out2d.reshape(N, Ho, Wo, Cout)
    return jnp.transpose(out_nhwc, (0, 3, 1, 2))


def _reference(x_nchw, params, groups):
    """Pure-JAX reference (unfolded BN, unfused convs, explicit shuffle)."""
    f32 = jnp.float32
    x = jnp.transpose(x_nchw, (0, 2, 3, 1)).astype(f32)    # NHWC

    def dw_s2(y, w):
        n, h, wd, c = y.shape
        ho, wo = (h - 3) // 2 + 1, (wd - 3) // 2 + 1
        acc = jnp.zeros((n, ho, wo, c), f32)
        for kh in range(3):
            for kw in range(3):
                acc = acc + y[:, kh:kh + 2 * ho - 1:2,
                              kw:kw + 2 * wo - 1:2, :] * w[kh, kw]
        return acc

    def pw(y, w):
        return jnp.sum(y[..., None] * w, axis=-2)

    def bn(y, s, b):
        return y * s[0] + b[0]

    left = dw_s2(x, params['wdwl'])
    left = bn(left, params['sl1'], params['bl1'])
    left = bn(pw(left, params['wl']), params['sl2'], params['bl2'])
    left = jnp.maximum(left, 0.0)

    right = jnp.maximum(bn(pw(x, params['wr1']),
                           params['sr1'], params['br1']), 0.0)
    right = dw_s2(right, params['wdwr'])
    right = bn(right, params['sr2'], params['br2'])
    right = bn(pw(right, params['wr2']), params['sr3'], params['br3'])
    right = jnp.maximum(right, 0.0)

    cat = jnp.concatenate([left, right], axis=-1)          # NHWC
    n, ho, wo, c = cat.shape
    g = groups
    shuf = (cat.reshape(n, ho, wo, g, c // g)
               .swapaxes(3, 4)
               .reshape(n, ho, wo, c))
    return jnp.transpose(shuf, (0, 3, 1, 2))               # NCHW


if __name__ == "__main__":
    key = jax.random.PRNGKey(0)
    kx, kp = jax.random.split(key)
    N, Cin, H, W = 2, 4, 16, 16
    Cout = 8

    x = jax.random.normal(kx, (N, Cin, H, W), jnp.float32)
    params = init_params(kp, Cin, Cout)

    out = jax.block_until_ready(down_unit_forward(x, params, groups=2))
    ref = jax.block_until_ready(_reference(x, params, groups=2))

    assert out.shape == (N, Cout, (H - 3) // 2 + 1, (W - 3) // 2 + 1), out.shape
    assert bool(jnp.all(jnp.isfinite(out)))
    assert bool(jnp.allclose(out, ref, rtol=5e-2, atol=5e-2)), (
        float(jnp.max(jnp.abs(out - ref))))
    print("KERNEL_OK")
</pallas_src>

<mosaic_0001>
module attributes {stable_mosaic.version = 11 : i64} {
  func.func @_down_unit_kernel(%arg0: i32, %arg1: memref<4x8x8x4xf32, #tpu.memory_space<vmem>>, %arg2: memref<2x3x3x4xf32, #tpu.memory_space<vmem>>, %arg3: memref<4x4xf32, #tpu.memory_space<vmem>>, %arg4: memref<1x4xf32, #tpu.memory_space<vmem>>, %arg5: memref<8x8xf32, #tpu.memory_space<vmem>>, %arg6: memref<1x8xf32, #tpu.memory_space<vmem>>, %arg7: memref<1x49x8xf32, #tpu.memory_space<vmem>>) attributes {dimension_semantics = [#tpu.dimension_semantics<parallel>], iteration_bounds = array<i64: 2>, scalar_prefetch = 0 : i64, scratch_operands = 0 : i64, tpu.core_type = #tpu.core_type<tc>, window_params = [{transform_indices = @transform_0, window_bounds = array<i64: 4, 8, 8, 4>}, {pipeline_mode = #tpu.pipeline_mode<synchronous>, transform_indices = @transform_1, window_bounds = array<i64: 2, 3, 3, 4>}, {pipeline_mode = #tpu.pipeline_mode<synchronous>, transform_indices = @transform_2, window_bounds = array<i64: 4, 4>}, {pipeline_mode = #tpu.pipeline_mode<synchronous>, transform_indices = @transform_3, window_bounds = array<i64: 1, 4>}, {pipeline_mode = #tpu.pipeline_mode<synchronous>, transform_indices = @transform_4, window_bounds = array<i64: 8, 8>}, {pipeline_mode = #tpu.pipeline_mode<synchronous>, transform_indices = @transform_5, window_bounds = array<i64: 1, 8>}, {transform_indices = @transform_6, window_bounds = array<i64: 1, 49, 8>}]} {
    %c0 = arith.constant 0 : index
    %c0_0 = arith.constant 0 : index
    %c0_1 = arith.constant 0 : index
    %c0_2 = arith.constant 0 : index
    %0 = vector.load %arg1[%c0, %c0_0, %c0_1, %c0_2] : memref<4x8x8x4xf32, #tpu.memory_space<vmem>>, vector<4x8x8x4xf32>
    %c0_3 = arith.constant 0 : index
    %c0_4 = arith.constant 0 : index
    %1 = vector.load %arg3[%c0_3, %c0_4] : memref<4x4xf32, #tpu.memory_space<vmem>>, vector<4x4xf32>
    %c0_5 = arith.constant 0 : index
    %c0_6 = arith.constant 0 : index
    %2 = vector.load %arg4[%c0_5, %c0_6] : memref<1x4xf32, #tpu.memory_space<vmem>>, vector<1x4xf32>
    %3 = vector.shape_cast %0 : vector<4x8x8x4xf32> to vector<256x4xf32>
    %cst = arith.constant dense<0.000000e+00> : vector<256x4xf32>
    %4 = tpu.matmul %3, %1, %cst {dimension_numbers = #tpu.dot_dimension_numbers<[1], [0], [0], [1], [0, 0, 1, 1], [], []>} : vector<256x4xf32>, vector<4x4xf32>, vector<256x4xf32> -> vector<256x4xf32>
    %5 = vector.broadcast %2 : vector<1x4xf32> to vector<256x4xf32>
    %6 = arith.addf %4, %5 : vector<256x4xf32>
    %cst_7 = arith.constant 0.000000e+00 : f32
    %7 = vector.broadcast %cst_7 : f32 to vector<256x4xf32>
    %8 = arith.maximumf %6, %7 : vector<256x4xf32>
    %9 = vector.shape_cast %8 : vector<256x4xf32> to vector<4x8x8x4xf32>
    %c0_8 = arith.constant 0 : index
    %c0_9 = arith.constant 0 : index
    %c0_10 = arith.constant 0 : index
    %c0_11 = arith.constant 0 : index
    %10 = vector.load %arg2[%c0_8, %c0_9, %c0_10, %c0_11] : memref<2x3x3x4xf32, #tpu.memory_space<vmem>>, vector<2x3x3x4xf32>
    %11 = vector.extract_strided_slice %10 {offsets = [0, 0, 0, 0], sizes = [1, 3, 3, 4], strides = [1, 1, 1, 1]} : vector<2x3x3x4xf32> to vector<1x3x3x4xf32>
    %12 = vector.shape_cast %11 : vector<1x3x3x4xf32> to vector<3x3x4xf32>
    %13 = vector.extract_strided_slice %0 {offsets = [0, 0, 0, 0], sizes = [1, 7, 7, 4], strides = [1, 1, 1, 1]} : vector<4x8x8x4xf32> to vector<1x7x7x4xf32>
    %14 = vector.shape_cast %13 : vector<1x7x7x4xf32> to vector<7x7x4xf32>
    %15 = vector.extract_strided_slice %12 {offsets = [0, 0, 0], sizes = [1, 1, 4], strides = [1, 1, 1]} : vector<3x3x4xf32> to vector<1x1x4xf32>
    %16 = vector.shape_cast %15 : vector<1x1x4xf32> to vector<4xf32>
    %17 = vector.shape_cast %16 : vector<4xf32> to vector<1x1x4xf32>
    %18 = vector.broadcast %17 : vector<1x1x4xf32> to vector<7x7x4xf32>
    %19 = arith.mulf %14, %18 : vector<7x7x4xf32>
    %20 = vector.extract_strided_slice %0 {offsets = [1, 0, 0, 0], sizes = [1, 7, 7, 4], strides = [1, 1, 1, 1]} : vector<4x8x8x4xf32> to vector<1x7x7x4xf32>
    %21 = vector.shape_cast %20 : vector<1x7x7x4xf32> to vector<7x7x4xf32>
    %22 = vector.extract_strided_slice %12 {offsets = [0, 1, 0], sizes = [1, 1, 4], strides = [1, 1, 1]} : vector<3x3x4xf32> to vector<1x1x4xf32>
    %23 = vector.shape_cast %22 : vector<1x1x4xf32> to vector<4xf32>
    %24 = vector.shape_cast %23 : vector<4xf32> to vector<1x1x4xf32>
    %25 = vector.broadcast %24 : vector<1x1x4xf32> to vector<7x7x4xf32>
    %26 = arith.mulf %21, %25 : vector<7x7x4xf32>
    %27 = arith.addf %19, %26 : vector<7x7x4xf32>
    %28 = vector.extract_strided_slice %0 {offsets = [0, 0, 1, 0], sizes = [1, 7, 7, 4], strides = [1, 1, 1, 1]} : vector<4x8x8x4xf32> to vector<1x7x7x4xf32>
    %29 = vector.shape_cast %28 : vector<1x7x7x4xf32> to vector<7x7x4xf32>
    %30 = vector.extract_strided_slice %12 {offsets = [0, 2, 0], sizes = [1, 1, 4], strides = [1, 1, 1]} : vector<3x3x4xf32> to vector<1x1x4xf32>
    %31 = vector.shape_cast %30 : vector<1x1x4xf32> to vector<4xf32>
    %32 = vector.shape_cast %31 : vector<4xf32> to vector<1x1x4xf32>
    %33 = vector.broadcast %32 : vector<1x1x4xf32> to vector<7x7x4xf32>
    %34 = arith.mulf %29, %33 : vector<7x7x4xf32>
    %35 = arith.addf %27, %34 : vector<7x7x4xf32>
    %36 = vector.extract_strided_slice %0 {offsets = [2, 0, 0, 0], sizes = [1, 7, 7, 4], strides = [1, 1, 1, 1]} : vector<4x8x8x4xf32> to vector<1x7x7x4xf32>
    %37 = vector.shape_cast %36 : vector<1x7x7x4xf32> to vector<7x7x4xf32>
    %38 = vector.extract_strided_slice %12 {offsets = [1, 0, 0], sizes = [1, 1, 4], strides = [1, 1, 1]} : vector<3x3x4xf32> to vector<1x1x4xf32>
    %39 = vector.shape_cast %38 : vector<1x1x4xf32> to vector<4xf32>
    %40 = vector.shape_cast %39 : vector<4xf32> to vector<1x1x4xf32>
    %41 = vector.broadcast %40 : vector<1x1x4xf32> to vector<7x7x4xf32>
    %42 = arith.mulf %37, %41 : vector<7x7x4xf32>
    %43 = arith.addf %35, %42 : vector<7x7x4xf32>
    %44 = vector.extract_strided_slice %0 {offsets = [3, 0, 0, 0], sizes = [1, 7, 7, 4], strides = [1, 1, 1, 1]} : vector<4x8x8x4xf32> to vector<1x7x7x4xf32>
    %45 = vector.shape_cast %44 : vector<1x7x7x4xf32> to vector<7x7x4xf32>
    %46 = vector.extract_strided_slice %12 {offsets = [1, 1, 0], sizes = [1, 1, 4], strides = [1, 1, 1]} : vector<3x3x4xf32> to vector<1x1x4xf32>
    %47 = vector.shape_cast %46 : vector<1x1x4xf32> to vector<4xf32>
    %48 = vector.shape_cast %47 : vector<4xf32> to vector<1x1x4xf32>
    %49 = vector.broadcast %48 : vector<1x1x4xf32> to vector<7x7x4xf32>
    %50 = arith.mulf %45, %49 : vector<7x7x4xf32>
    %51 = arith.addf %43, %50 : vector<7x7x4xf32>
    %52 = vector.extract_strided_slice %0 {offsets = [2, 0, 1, 0], sizes = [1, 7, 7, 4], strides = [1, 1, 1, 1]} : vector<4x8x8x4xf32> to vector<1x7x7x4xf32>
    %53 = vector.shape_cast %52 : vector<1x7x7x4xf32> to vector<7x7x4xf32>
    %54 = vector.extract_strided_slice %12 {offsets = [1, 2, 0], sizes = [1, 1, 4], strides = [1, 1, 1]} : vector<3x3x4xf32> to vector<1x1x4xf32>
    %55 = vector.shape_cast %54 : vector<1x1x4xf32> to vector<4xf32>
    %56 = vector.shape_cast %55 : vector<4xf32> to vector<1x1x4xf32>
    %57 = vector.broadcast %56 : vector<1x1x4xf32> to vector<7x7x4xf32>
    %58 = arith.mulf %53, %57 : vector<7x7x4xf32>
    %59 = arith.addf %51, %58 : vector<7x7x4xf32>
    %60 = vector.extract_strided_slice %0 {offsets = [0, 1, 0, 0], sizes = [1, 7, 7, 4], strides = [1, 1, 1, 1]} : vector<4x8x8x4xf32> to vector<1x7x7x4xf32>
    %61 = vector.shape_cast %60 : vector<1x7x7x4xf32> to vector<7x7x4xf32>
    %62 = vector.extract_strided_slice %12 {offsets = [2, 0, 0], sizes = [1, 1, 4], strides = [1, 1, 1]} : vector<3x3x4xf32> to vector<1x1x4xf32>
    %63 = vector.shape_cast %62 : vector<1x1x4xf32> to vector<4xf32>
    %64 = vector.shape_cast %63 : vector<4xf32> to vector<1x1x4xf32>
    %65 = vector.broadcast %64 : vector<1x1x4xf32> to vector<7x7x4xf32>
    %66 = arith.mulf %61, %65 : vector<7x7x4xf32>
    %67 = arith.addf %59, %66 : vector<7x7x4xf32>
    %68 = vector.extract_strided_slice %0 {offsets = [1, 1, 0, 0], sizes = [1, 7, 7, 4], strides = [1, 1, 1, 1]} : vector<4x8x8x4xf32> to vector<1x7x7x4xf32>
    %69 = vector.shape_cast %68 : vector<1x7x7x4xf32> to vector<7x7x4xf32>
    %70 = vector.extract_strided_slice %12 {offsets = [2, 1, 0], sizes = [1, 1, 4], strides = [1, 1, 1]} : vector<3x3x4xf32> to vector<1x1x4xf32>
    %71 = vector.shape_cast %70 : vector<1x1x4xf32> to vector<4xf32>
    %72 = vector.shape_cast %71 : vector<4xf32> to vector<1x1x4xf32>
    %73 = vector.broadcast %72 : vector<1x1x4xf32> to vector<7x7x4xf32>
    %74 = arith.mulf %69, %73 : vector<7x7x4xf32>
    %75 = arith.addf %67, %74 : vector<7x7x4xf32>
    %76 = vector.extract_strided_slice %0 {offsets = [0, 1, 1, 0], sizes = [1, 7, 7, 4], strides = [1, 1, 1, 1]} : vector<4x8x8x4xf32> to vector<1x7x7x4xf32>
    %77 = vector.shape_cast %76 : vector<1x7x7x4xf32> to vector<7x7x4xf32>
    %78 = vector.extract_strided_slice %12 {offsets = [2, 2, 0], sizes = [1, 1, 4], strides = [1, 1, 1]} : vector<3x3x4xf32> to vector<1x1x4xf32>
    %79 = vector.shape_cast %78 : vector<1x1x4xf32> to vector<4xf32>
    %80 = vector.shape_cast %79 : vector<4xf32> to vector<1x1x4xf32>
    %81 = vector.broadcast %80 : vector<1x1x4xf32> to vector<7x7x4xf32>
    %82 = arith.mulf %77, %81 : vector<7x7x4xf32>
    %83 = arith.addf %75, %82 : vector<7x7x4xf32>
    %84 = vector.shape_cast %83 : vector<7x7x4xf32> to vector<49x4xf32>
    %85 = vector.extract_strided_slice %10 {offsets = [1, 0, 0, 0], sizes = [1, 3, 3, 4], strides = [1, 1, 1, 1]} : vector<2x3x3x4xf32> to vector<1x3x3x4xf32>
    %86 = vector.shape_cast %85 : vector<1x3x3x4xf32> to vector<3x3x4xf32>
    %87 = vector.extract_strided_slice %9 {offsets = [0, 0, 0, 0], sizes = [1, 7, 7, 4], strides = [1, 1, 1, 1]} : vector<4x8x8x4xf32> to vector<1x7x7x4xf32>
    %88 = vector.shape_cast %87 : vector<1x7x7x4xf32> to vector<7x7x4xf32>
    %89 = vector.extract_strided_slice %86 {offsets = [0, 0, 0], sizes = [1, 1, 4], strides = [1, 1, 1]} : vector<3x3x4xf32> to vector<1x1x4xf32>
    %90 = vector.shape_cast %89 : vector<1x1x4xf32> to vector<4xf32>
    %91 = vector.shape_cast %90 : vector<4xf32> to vector<1x1x4xf32>
    %92 = vector.broadcast %91 : vector<1x1x4xf32> to vector<7x7x4xf32>
    %93 = arith.mulf %88, %92 : vector<7x7x4xf32>
    %94 = vector.extract_strided_slice %9 {offsets = [1, 0, 0, 0], sizes = [1, 7, 7, 4], strides = [1, 1, 1, 1]} : vector<4x8x8x4xf32> to vector<1x7x7x4xf32>
    %95 = vector.shape_cast %94 : vector<1x7x7x4xf32> to vector<7x7x4xf32>
    %96 = vector.extract_strided_slice %86 {offsets = [0, 1, 0], sizes = [1, 1, 4], strides = [1, 1, 1]} : vector<3x3x4xf32> to vector<1x1x4xf32>
    %97 = vector.shape_cast %96 : vector<1x1x4xf32> to vector<4xf32>
    %98 = vector.shape_cast %97 : vector<4xf32> to vector<1x1x4xf32>
    %99 = vector.broadcast %98 : vector<1x1x4xf32> to vector<7x7x4xf32>
    %100 = arith.mulf %95, %99 : vector<7x7x4xf32>
    %101 = arith.addf %93, %100 : vector<7x7x4xf32>
    %102 = vector.extract_strided_slice %9 {offsets = [0, 0, 1, 0], sizes = [1, 7, 7, 4], strides = [1, 1, 1, 1]} : vector<4x8x8x4xf32> to vector<1x7x7x4xf32>
    %103 = vector.shape_cast %102 : vector<1x7x7x4xf32> to vector<7x7x4xf32>
    %104 = vector.extract_strided_slice %86 {offsets = [0, 2, 0], sizes = [1, 1, 4], strides = [1, 1, 1]} : vector<3x3x4xf32> to vector<1x1x4xf32>
    %105 = vector.shape_cast %104 : vector<1x1x4xf32> to vector<4xf32>
    %106 = vector.shape_cast %105 : vector<4xf32> to vector<1x1x4xf32>
    %107 = vector.broadcast %106 : vector<1x1x4xf32> to vector<7x7x4xf32>
    %108 = arith.mulf %103, %107 : vector<7x7x4xf32>
    %109 = arith.addf %101, %108 : vector<7x7x4xf32>
    %110 = vector.extract_strided_slice %9 {offsets = [2, 0, 0, 0], sizes = [1, 7, 7, 4], strides = [1, 1, 1, 1]} : vector<4x8x8x4xf32> to vector<1x7x7x4xf32>
    %111 = vector.shape_cast %110 : vector<1x7x7x4xf32> to vector<7x7x4xf32>
    %112 = vector.extract_strided_slice %86 {offsets = [1, 0, 0], sizes = [1, 1, 4], strides = [1, 1, 1]} : vector<3x3x4xf32> to vector<1x1x4xf32>
    %113 = vector.shape_cast %112 : vector<1x1x4xf32> to vector<4xf32>
    %114 = vector.shape_cast %113 : vector<4xf32> to vector<1x1x4xf32>
    %115 = vector.broadcast %114 : vector<1x1x4xf32> to vector<7x7x4xf32>
    %116 = arith.mulf %111, %115 : vector<7x7x4xf32>
    %117 = arith.addf %109, %116 : vector<7x7x4xf32>
    %118 = vector.extract_strided_slice %9 {offsets = [3, 0, 0, 0], sizes = [1, 7, 7, 4], strides = [1, 1, 1, 1]} : vector<4x8x8x4xf32> to vector<1x7x7x4xf32>
    %119 = vector.shape_cast %118 : vector<1x7x7x4xf32> to vector<7x7x4xf32>
    %120 = vector.extract_strided_slice %86 {offsets = [1, 1, 0], sizes = [1, 1, 4], strides = [1, 1, 1]} : vector<3x3x4xf32> to vector<1x1x4xf32>
    %121 = vector.shape_cast %120 : vector<1x1x4xf32> to vector<4xf32>
    %122 = vector.shape_cast %121 : vector<4xf32> to vector<1x1x4xf32>
    %123 = vector.broadcast %122 : vector<1x1x4xf32> to vector<7x7x4xf32>
    %124 = arith.mulf %119, %123 : vector<7x7x4xf32>
    %125 = arith.addf %117, %124 : vector<7x7x4xf32>
    %126 = vector.extract_strided_slice %9 {offsets = [2, 0, 1, 0], sizes = [1, 7, 7, 4], strides = [1, 1, 1, 1]} : vector<4x8x8x4xf32> to vector<1x7x7x4xf32>
    %127 = vector.shape_cast %126 : vector<1x7x7x4xf32> to vector<7x7x4xf32>
    %128 = vector.extract_strided_slice %86 {offsets = [1, 2, 0], sizes = [1, 1, 4], strides = [1, 1, 1]} : vector<3x3x4xf32> to vector<1x1x4xf32>
    %129 = vector.shape_cast %128 : vector<1x1x4xf32> to vector<4xf32>
    %130 = vector.shape_cast %129 : vector<4xf32> to vector<1x1x4xf32>
    %131 = vector.broadcast %130 : vector<1x1x4xf32> to vector<7x7x4xf32>
    %132 = arith.mulf %127, %131 : vector<7x7x4xf32>
    %133 = arith.addf %125, %132 : vector<7x7x4xf32>
    %134 = vector.extract_strided_slice %9 {offsets = [0, 1, 0, 0], sizes = [1, 7, 7, 4], strides = [1, 1, 1, 1]} : vector<4x8x8x4xf32> to vector<1x7x7x4xf32>
    %135 = vector.shape_cast %134 : vector<1x7x7x4xf32> to vector<7x7x4xf32>
    %136 = vector.extract_strided_slice %86 {offsets = [2, 0, 0], sizes = [1, 1, 4], strides = [1, 1, 1]} : vector<3x3x4xf32> to vector<1x1x4xf32>
    %137 = vector.shape_cast %136 : vector<1x1x4xf32> to vector<4xf32>
    %138 = vector.shape_cast %137 : vector<4xf32> to vector<1x1x4xf32>
    %139 = vector.broadcast %138 : vector<1x1x4xf32> to vector<7x7x4xf32>
    %140 = arith.mulf %135, %139 : vector<7x7x4xf32>
    %141 = arith.addf %133, %140 : vector<7x7x4xf32>
    %142 = vector.extract_strided_slice %9 {offsets = [1, 1, 0, 0], sizes = [1, 7, 7, 4], strides = [1, 1, 1, 1]} : vector<4x8x8x4xf32> to vector<1x7x7x4xf32>
    %143 = vector.shape_cast %142 : vector<1x7x7x4xf32> to vector<7x7x4xf32>
    %144 = vector.extract_strided_slice %86 {offsets = [2, 1, 0], sizes = [1, 1, 4], strides = [1, 1, 1]} : vector<3x3x4xf32> to vector<1x1x4xf32>
    %145 = vector.shape_cast %144 : vector<1x1x4xf32> to vector<4xf32>
    %146 = vector.shape_cast %145 : vector<4xf32> to vector<1x1x4xf32>
    %147 = vector.broadcast %146 : vector<1x1x4xf32> to vector<7x7x4xf32>
    %148 = arith.mulf %143, %147 : vector<7x7x4xf32>
    %149 = arith.addf %141, %148 : vector<7x7x4xf32>
    %150 = vector.extract_strided_slice %9 {offsets = [0, 1, 1, 0], sizes = [1, 7, 7, 4], strides = [1, 1, 1, 1]} : vector<4x8x8x4xf32> to vector<1x7x7x4xf32>
    %151 = vector.shape_cast %150 : vector<1x7x7x4xf32> to vector<7x7x4xf32>
    %152 = vector.extract_strided_slice %86 {offsets = [2, 2, 0], sizes = [1, 1, 4], strides = [1, 1, 1]} : vector<3x3x4xf32> to vector<1x1x4xf32>
    %153 = vector.shape_cast %152 : vector<1x1x4xf32> to vector<4xf32>
    %154 = vector.shape_cast %153 : vector<4xf32> to vector<1x1x4xf32>
    %155 = vector.broadcast %154 : vector<1x1x4xf32> to vector<7x7x4xf32>
    %156 = arith.mulf %151, %155 : vector<7x7x4xf32>
    %157 = arith.addf %149, %156 : vector<7x7x4xf32>
    %158 = vector.shape_cast %157 : vector<7x7x4xf32> to vector<49x4xf32>
    %c0_12 = arith.constant 0 : index
    %c0_13 = arith.constant 0 : index
    %159 = vector.load %arg5[%c0_12, %c0_13] : memref<8x8xf32, #tpu.memory_space<vmem>>, vector<8x8xf32>
    %c0_14 = arith.constant 0 : index
    %c0_15 = arith.constant 0 : index
    %160 = vector.load %arg6[%c0_14, %c0_15] : memref<1x8xf32, #tpu.memory_space<vmem>>, vector<1x8xf32>
    %161 = vector.extract_strided_slice %159 {offsets = [0, 0], sizes = [4, 8], strides = [1, 1]} : vector<8x8xf32> to vector<4x8xf32>
    %cst_16 = arith.constant dense<0.000000e+00> : vector<49x8xf32>
    %162 = tpu.matmul %84, %161, %cst_16 {dimension_numbers = #tpu.dot_dimension_numbers<[1], [0], [0], [1], [0, 0, 1, 1], [], []>} : vector<49x4xf32>, vector<4x8xf32>, vector<49x8xf32> -> vector<49x8xf32>
    %163 = vector.extract_strided_slice %159 {offsets = [4, 0], sizes = [4, 8], strides = [1, 1]} : vector<8x8xf32> to vector<4x8xf32>
    %cst_17 = arith.constant dense<0.000000e+00> : vector<49x8xf32>
    %164 = tpu.matmul %158, %163, %cst_17 {dimension_numbers = #tpu.dot_dimension_numbers<[1], [0], [0], [1], [0, 0, 1, 1], [], []>} : vector<49x4xf32>, vector<4x8xf32>, vector<49x8xf32> -> vector<49x8xf32>
    %165 = arith.addf %162, %164 : vector<49x8xf32>
    %166 = vector.broadcast %160 : vector<1x8xf32> to vector<49x8xf32>
    %167 = arith.addf %165, %166 : vector<49x8xf32>
    %cst_18 = arith.constant 0.000000e+00 : f32
    %168 = vector.broadcast %cst_18 : f32 to vector<49x8xf32>
    %169 = arith.maximumf %167, %168 : vector<49x8xf32>
    %c0_19 = arith.constant 0 : index
    %c0_20 = arith.constant 0 : index
    %c0_21 = arith.constant 0 : index
    %170 = vector.load %arg7[%c0_19, %c0_20, %c0_21] : memref<1x49x8xf32, #tpu.memory_space<vmem>>, vector<1x49x8xf32>
    %171 = vector.shape_cast %170 : vector<1x49x8xf32> to vector<49x8xf32>
    %172 = vector.shape_cast %169 : vector<49x8xf32> to vector<1x49x8xf32>
    tpu.vector_store %arg7[%c0_19, %c0_20, %c0_21], %172 {strides = array<i32>} : memref<1x49x8xf32, #tpu.memory_space<vmem>>, vector<1x49x8xf32>,
    return
  }
  func.func @transform_0(%arg0: i32) -> (i32, i32, i32, i32) {
    %c0_i32 = arith.constant 0 : i32
    %c0_i32_0 = arith.constant 0 : i32
    %c0_i32_1 = arith.constant 0 : i32
    %c0_i32_2 = arith.constant 0 : i32
    return %arg0, %c0_i32, %c0_i32_0, %c0_i32_1 : i32, i32, i32, i32
  }
  func.func @transform_1(%arg0: i32) -> (i32, i32, i32, i32) {
    %c0_i32 = arith.constant 0 : i32
    %c0_i32_0 = arith.constant 0 : i32
    %c0_i32_1 = arith.constant 0 : i32
    %c0_i32_2 = arith.constant 0 : i32
    %c0_i32_3 = arith.constant 0 : i32
    return %c0_i32, %c0_i32_0, %c0_i32_1, %c0_i32_2 : i32, i32, i32, i32
  }
  func.func @transform_2(%arg0: i32) -> (i32, i32) {
    %c0_i32 = arith.constant 0 : i32
    %c0_i32_0 = arith.constant 0 : i32
    %c0_i32_1 = arith.constant 0 : i32
    return %c0_i32, %c0_i32_0 : i32, i32
  }
  func.func @transform_3(%arg0: i32) -> (i32, i32) {
    %c0_i32 = arith.constant 0 : i32
    %c0_i32_0 = arith.constant 0 : i32
    %c0_i32_1 = arith.constant 0 : i32
    return %c0_i32, %c0_i32_0 : i32, i32
  }
  func.func @transform_4(%arg0: i32) -> (i32, i32) {
    %c0_i32 = arith.constant 0 : i32
    %c0_i32_0 = arith.constant 0 : i32
    %c0_i32_1 = arith.constant 0 : i32
    return %c0_i32, %c0_i32_0 : i32, i32
  }
  func.func @transform_5(%arg0: i32) -> (i32, i32) {
    %c0_i32 = arith.constant 0 : i32
    %c0_i32_0 = arith.constant 0 : i32
    %c0_i32_1 = arith.constant 0 : i32
    return %c0_i32, %c0_i32_0 : i32, i32
  }
  func.func @transform_6(%arg0: i32) -> (i32, i32, i32) {
    %c0_i32 = arith.constant 0 : i32
    %c0_i32_0 = arith.constant 0 : i32
    %c0_i32_1 = arith.constant 0 : i32
    return %arg0, %c0_i32, %c0_i32_0 : i32, i32, i32
  }
}

</mosaic_0001>

<llo_original>
// kernel: tpu_custom_call.1
$region0: #{tpu_custom_call.1}
  #allocation0 [shape = 'u32[]', space=smem, size = 0x4, offset = 0x4, fixed_abs, tag = 'smem constant byte address 0x4 - core index']
  #allocation1 [shape = 'u32[144,128]{1,0:T(1,128)}', space=vmem, size = 0x12000, scoped, tag = 'internal scratch']
  %s0 = inlined_call_operand.vmem [shape: f32[8,8,8,4], index: 0, kind: input, shape index: {}]
  %s1 = inlined_call_operand.vmem [shape: f32[2,3,3,4], index: 1, kind: input, shape index: {}]
  %s2 = inlined_call_operand.vmem [shape: f32[4,4], index: 2, kind: input, shape index: {}]
  %s3 = inlined_call_operand.vmem [shape: f32[1,4], index: 3, kind: input, shape index: {}]
  %s4 = inlined_call_operand.vmem [shape: f32[8,8], index: 4, kind: input, shape index: {}]
  %s5 = inlined_call_operand.vmem [shape: f32[1,8], index: 5, kind: input, shape index: {}]
  %s6 = inlined_call_operand.vmem [shape: f32[2,49,8], index: 6, kind: output, shape index: {}]
  %s7 = sld [smem:[#allocation0]]
  $region57: #{tpu_custom_call.1} parent=0
    _
  %s9 = ssub.s32 1, %s7
  %s10 = scalar_select 0, %s9, %s7
  loop: start=0, step=1, limit=4
  $region2: #{tpu_custom_call.1} parent=0 // loop_pre_header
    _
  $region3: #{tpu_custom_call.1} parent=0 // loop_header
    %s12 = sphi 0, %s16
    %p13 = scmp.ge.s32.totalorder %s12, 4
    %s22 = sphi 0, %s24
    %s25 = sphi 0, %s22
    %s26 = sphi 0, %s25
    %s42 = sphi 0, %s26
    %s46 = sphi 0, %s46
    %s48 = sphi 0, %s46
    %s49 = sphi 0, %s48
    %s63 = sphi 0, %s49
    %s67 = sphi 0, %s67
    %s69 = sphi 0, %s67
    %s70 = sphi 0, %s69
    %s84 = sphi 0, %s70
    %s88 = sphi 0, %s88
    %s90 = sphi 0, %s88
    %s91 = sphi 0, %s90
    %s105 = sphi 0, %s91
    %s109 = sphi 0, %s109
    %s111 = sphi 0, %s109
    %s112 = sphi 0, %s111
    %s126 = sphi 0, %s112
    %s130 = sphi 0, %s130
    %s132 = sphi 0, %s130
    %s133 = sphi 0, %s132
    %s147 = sphi 0, %s133
    %s153 = sphi 0, %s155
    %s156 = sphi 0, %s153
    %s157 = sphi 0, %s156
    %s173 = sphi 0, %s157
  $region4: #{tpu_custom_call.1} parent=0 // loop_header_branch
    %15 = sbr.rel (%p13) target = $region8
  $region5: #{tpu_custom_call.1} parent=0 // loop_body
    %s17 = ssub.s32 %s12, 1
    %s18 = ssub.s32 %s12, 2
    %s19 = sadd.s32 %s12, 1
    %s20 = ssub.s32 %s12, %s19
    %p21 = scmp.eq.s32.totalorder %s20, 0
    %s23 = sadd.s32 %s22, 1
    %s24 = scalar_select %p21, %s22, %s23
    %p27 = pneg %p21
    %p28 = scmp.eq.s32.totalorder %s12, 1
    %p29 = por %p27, %p28
    %p30 = scmp.ne.s32.totalorder %s22, %s25
    %p31 = scmp.eq.s32.totalorder %s12, 0
    %p32 = por %p30, %p31
    %p33 = scmp.ne.s32.totalorder %s22, %s25
    %p34 = scmp.eq.s32.totalorder %s17, 1
    %p35 = por %p33, %p34
    %p36 = scmp.ne.s32.totalorder %s25, %s26
    %p37 = scmp.eq.s32.totalorder %s17, 0
    %p38 = por %p36, %p37
    %p39 = scmp.ne.s32.totalorder %s25, %s26
    %p40 = scmp.eq.s32.totalorder %s18, 1
    %p41 = por %p39, %p40
    %p43 = scmp.ne.s32.totalorder %s26, %s42
    %p44 = scmp.eq.s32.totalorder %s18, 0
    %p45 = por %p43, %p44
    %s47 = sadd.s32 %s46, 1
    %p50 = scmp.eq.s32.totalorder %s12, 1
    %p51 = scmp.ne.s32.totalorder %s46, %s48
    %p52 = scmp.eq.s32.totalorder %s12, 0
    %p53 = por %p51, %p52
    %p54 = scmp.ne.s32.totalorder %s46, %s48
    %p55 = scmp.eq.s32.totalorder %s17, 1
    %p56 = por %p54, %p55
    %p57 = scmp.ne.s32.totalorder %s48, %s49
    %p58 = scmp.eq.s32.totalorder %s17, 0
    %p59 = por %p57, %p58
    %p60 = scmp.ne.s32.totalorder %s48, %s49
    %p61 = scmp.eq.s32.totalorder %s18, 1
    %p62 = por %p60, %p61
    %p64 = scmp.ne.s32.totalorder %s49, %s63
    %p65 = scmp.eq.s32.totalorder %s18, 0
    %p66 = por %p64, %p65
    %s68 = sadd.s32 %s67, 1
    %p71 = scmp.eq.s32.totalorder %s12, 1
    %p72 = scmp.ne.s32.totalorder %s67, %s69
    %p73 = scmp.eq.s32.totalorder %s12, 0
    %p74 = por %p72, %p73
    %p75 = scmp.ne.s32.totalorder %s67, %s69
    %p76 = scmp.eq.s32.totalorder %s17, 1
    %p77 = por %p75, %p76
    %p78 = scmp.ne.s32.totalorder %s69, %s70
    %p79 = scmp.eq.s32.totalorder %s17, 0
    %p80 = por %p78, %p79
    %p81 = scmp.ne.s32.totalorder %s69, %s70
    %p82 = scmp.eq.s32.totalorder %s18, 1
    %p83 = por %p81, %p82
    %p85 = scmp.ne.s32.totalorder %s70, %s84
    %p86 = scmp.eq.s32.totalorder %s18, 0
    %p87 = por %p85, %p86
    %s89 = sadd.s32 %s88, 1
    %p92 = scmp.eq.s32.totalorder %s12, 1
    %p93 = scmp.ne.s32.totalorder %s88, %s90
    %p94 = scmp.eq.s32.totalorder %s12, 0
    %p95 = por %p93, %p94
    %p96 = scmp.ne.s32.totalorder %s88, %s90
    %p97 = scmp.eq.s32.totalorder %s17, 1
    %p98 = por %p96, %p97
    %p99 = scmp.ne.s32.totalorder %s90, %s91
    %p100 = scmp.eq.s32.totalorder %s17, 0
    %p101 = por %p99, %p100
    %p102 = scmp.ne.s32.totalorder %s90, %s91
    %p103 = scmp.eq.s32.totalorder %s18, 1
    %p104 = por %p102, %p103
    %p106 = scmp.ne.s32.totalorder %s91, %s105
    %p107 = scmp.eq.s32.totalorder %s18, 0
    %p108 = por %p106, %p107
    %s110 = sadd.s32 %s109, 1
    %p113 = scmp.eq.s32.totalorder %s12, 1
    %p114 = scmp.ne.s32.totalorder %s109, %s111
    %p115 = scmp.eq.s32.totalorder %s12, 0
    %p116 = por %p114, %p115
    %p117 = scmp.ne.s32.totalorder %s109, %s111
    %p118 = scmp.eq.s32.totalorder %s17, 1
    %p119 = por %p117, %p118
    %p120 = scmp.ne.s32.totalorder %s111, %s112
    %p121 = scmp.eq.s32.totalorder %s17, 0
    %p122 = por %p120, %p121
    %p123 = scmp.ne.s32.totalorder %s111, %s112
    %p124 = scmp.eq.s32.totalorder %s18, 1
    %p125 = por %p123, %p124
    %p127 = scmp.ne.s32.totalorder %s112, %s126
    %p128 = scmp.eq.s32.totalorder %s18, 0
    %p129 = por %p127, %p128
    %s131 = sadd.s32 %s130, 1
    %p134 = scmp.eq.s32.totalorder %s12, 1
    %p135 = scmp.ne.s32.totalorder %s130, %s132
    %p136 = scmp.eq.s32.totalorder %s12, 0
    %p137 = por %p135, %p136
    %p138 = scmp.ne.s32.totalorder %s130, %s132
    %p139 = scmp.eq.s32.totalorder %s17, 1
    %p140 = por %p138, %p139
    %p141 = scmp.ne.s32.totalorder %s132, %s133
    %p142 = scmp.eq.s32.totalorder %s17, 0
    %p143 = por %p141, %p142
    %p144 = scmp.ne.s32.totalorder %s132, %s133
    %p145 = scmp.eq.s32.totalorder %s18, 1
    %p146 = por %p144, %p145
    %p148 = scmp.ne.s32.totalorder %s133, %s147
    %p149 = scmp.eq.s32.totalorder %s18, 0
    %p150 = por %p148, %p149
    %s151 = ssub.s32 %s12, %s19
    %p152 = scmp.eq.s32.totalorder %s151, 0
    %s154 = sadd.s32 %s153, 1
    %s155 = scalar_select %p152, %s153, %s154
    %p158 = pneg %p152
    %p159 = scmp.eq.s32.totalorder %s12, 1
    %p160 = por %p158, %p159
    %p161 = scmp.ne.s32.totalorder %s153, %s156
    %p162 = scmp.eq.s32.totalorder %s12, 0
    %p163 = por %p161, %p162
    %p164 = scmp.ne.s32.totalorder %s153, %s156
    %p165 = scmp.eq.s32.totalorder %s17, 1
    %p166 = por %p164, %p165
    %p167 = scmp.ne.s32.totalorder %s156, %s157
    %p168 = scmp.eq.s32.totalorder %s17, 0
    %p169 = por %p167, %p168
    %p170 = scmp.ne.s32.totalorder %s156, %s157
    %p171 = scmp.eq.s32.totalorder %s18, 1
    %p172 = por %p170, %p171
    %p174 = scmp.ne.s32.totalorder %s157, %s173
    %p175 = scmp.eq.s32.totalorder %s18, 0
    %p176 = por %p174, %p175
    %p177 = scmp.le.s32.totalorder 1, %s12
    %p178 = scmp.lt.s32.totalorder %s12, 3
    %p179 = pnand %p177, %p178
    %p180 = pneg %p179
    // Predicated region
    $region9: #{tpu_custom_call.1} parent=5 // pred_check
      _
    $region10: #{tpu_custom_call.1} parent=5 // pred_check_branch
      %182 = sbr.rel (%p179) target = $region12
    $region11: #{tpu_custom_call.1} parent=5 // pred_region
      %s183 = ssub.s32 %s12, 1
      // Predicated region
      $region13: #{tpu_custom_call.1} parent=11 // pred_check
        %p184 = pneg %p59
      $region14: #{tpu_custom_call.1} parent=11 // pred_check_branch
        %186 = sbr.rel (%p184) target = $region16
      $region15: #{tpu_custom_call.1} parent=11 // pred_region
        _
      $region16: #{tpu_custom_call.1} parent=11 // pred_fallthru
        _
      // Predicated region
      $region17: #{tpu_custom_call.1} parent=11 // pred_check
        %p187 = pneg %p80
      $region18: #{tpu_custom_call.1} parent=11 // pred_check_branch
        %189 = sbr.rel (%p187) target = $region20
      $region19: #{tpu_custom_call.1} parent=11 // pred_region
        _
      $region20: #{tpu_custom_call.1} parent=11 // pred_fallthru
        _
      // Predicated region
      $region21: #{tpu_custom_call.1} parent=11 // pred_check
        %p190 = pneg %p101
      $region22: #{tpu_custom_call.1} parent=11 // pred_check_branch
        %192 = sbr.rel (%p190) target = $region24
      $region23: #{tpu_custom_call.1} parent=11 // pred_region
        _
      $region24: #{tpu_custom_call.1} parent=11 // pred_fallthru
        _
      // Predicated region
      $region25: #{tpu_custom_call.1} parent=11 // pred_check
        %p193 = pneg %p122
      $region26: #{tpu_custom_call.1} parent=11 // pred_check_branch
        %195 = sbr.rel (%p193) target = $region28
      $region27: #{tpu_custom_call.1} parent=11 // pred_region
        _
      $region28: #{tpu_custom_call.1} parent=11 // pred_fallthru
        _
      // Predicated region
      $region29: #{tpu_custom_call.1} parent=11 // pred_check
        %p196 = pneg %p143
      $region30: #{tpu_custom_call.1} parent=11 // pred_check_branch
        %198 = sbr.rel (%p196) target = $region32
      $region31: #{tpu_custom_call.1} parent=11 // pred_region
        _
      $region32: #{tpu_custom_call.1} parent=11 // pred_fallthru
        _
    $region12: #{tpu_custom_call.1} parent=5 // pred_fallthru
      _
    %p199 = scmp.lt.s32.totalorder %s12, 2
    // Predicated region
    $region33: #{tpu_custom_call.1} parent=5 // pred_check
      %p200 = pneg %p199
    $region34: #{tpu_custom_call.1} parent=5 // pred_check_branch
      %202 = sbr.rel (%p200) target = $region36
    $region35: #{tpu_custom_call.1} parent=5 // pred_region
      // Predicated region
      $region37: #{tpu_custom_call.1} parent=35 // pred_check
        %p203 = pneg %p32
      $region38: #{tpu_custom_call.1} parent=35 // pred_check_branch
        %205 = sbr.rel (%p203) target = $region40
      $region39: #{tpu_custom_call.1} parent=35 // pred_region
        %s206 = smul.u32 4, %s12
        %p207 = scmp.lt.s32.totalorder %s206, 7
        %s208 = scalar_select %p207, %s206, 7
        %s209 = smul.addr %s208, 8
        %s210 = smul.addr %s209, 8
        %s211 = scalar_lea.vmem %s0, %s210
        %s212 = smul.u32 4, %s12
      $region40: #{tpu_custom_call.1} parent=35 // pred_fallthru
        _
    $region36: #{tpu_custom_call.1} parent=5 // pred_fallthru
      _
    %p213 = scmp.le.s32.totalorder 1, %s12
    %p214 = scmp.lt.s32.totalorder %s12, 3
    %p215 = pnand %p213, %p214
    %p216 = pneg %p215
    // Predicated region
    $region41: #{tpu_custom_call.1} parent=5 // pred_check
      _
    $region42: #{tpu_custom_call.1} parent=5 // pred_check_branch
      %218 = sbr.rel (%p215) target = $region44
    $region43: #{tpu_custom_call.1} parent=5 // pred_region
      %s219 = ssub.s32 %s12, 1
      %s220 = smul.u32 4, %s17
      %p221 = scmp.lt.s32.totalorder %s220, 7
      %s222 = scalar_select %p221, %s220, 7
      %s223 = smul.addr %s222, 8
      %s224 = smul.addr %s223, 8
      %s225 = scalar_lea.vmem %s0, %s224
      %p226 = pneg %p38
      %p227 = pneg %p35
      %p228 = pneg %p59
      %p229 = pneg %p56
      %p230 = pneg %p80
      %p231 = pneg %p77
      %p232 = pneg %p101
      %p233 = pneg %p98
      %p234 = pneg %p122
      %p235 = pneg %p119
      %p236 = pneg %p143
      %p237 = pneg %p140
      %p238 = pneg %p169
      %p239 = pneg %p166
      %p240 = scmp.lt.s32.totalorder %s17, 1
      %s241 = scalar_select %p240, %s17, 1
      %s242 = smul.addr %s241, 7
      %s243 = smul.addr %s242, 8
      %s244 = scalar_lea.vmem %s6, %s243
      %s245 = smul.u32 4, %s17
      %p246 = scmp.lt.s32.totalorder %s245, 7
      %s247 = scalar_select %p246, %s245, 7
      %s248 = smul.addr %s247, 8
      %s249 = smul.addr %s248, 8
      %s250 = scalar_lea.vmem %s0, %s249
      %s251 = smul.u32 4, %s17
      %p252 = scmp.lt.s32.totalorder %s17, 1
      %s253 = scalar_select %p252, %s17, 1
      %s254 = smul.addr %s253, 7
      %s255 = smul.addr %s254, 8
      %s256 = scalar_lea.vmem %s6, %s255
      %v257 = vld [vmem:[%s250] sm:$0xff]
      %v258 = vld [vmem:[%s250 + $0x8] sm:$0xff]
      %v259 = vld [vmem:[%s250 + $0x10] sm:$0xff]
      %v260 = vld [vmem:[%s250 + $0x18] sm:$0xff]
      %v261 = vld [vmem:[%s250 + $0x20] sm:$0xff]
      %v262 = vld [vmem:[%s250 + $0x28] sm:$0xff]
      %v263 = vld [vmem:[%s250 + $0x30] sm:$0xff]
      %v264 = vld [vmem:[%s250 + $0x38] sm:$0xff]
      %v265 = vld [vmem:[%s250 + $0x40] sm:$0xff]
      %v266 = vld [vmem:[%s250 + $0x48] sm:$0xff]
      %v267 = vld [vmem:[%s250 + $0x50] sm:$0xff]
      %v268 = vld [vmem:[%s250 + $0x58] sm:$0xff]
      %v269 = vld [vmem:[%s250 + $0x60] sm:$0xff]
      %v270 = vld [vmem:[%s250 + $0x68] sm:$0xff]
      %v271 = vld [vmem:[%s250 + $0x70] sm:$0xff]
      %v272 = vld [vmem:[%s250 + $0x78] sm:$0xff]
      %v273 = vld [vmem:[%s250 + $0x80] sm:$0xff]
      %v274 = vld [vmem:[%s250 + $0x88] sm:$0xff]
      %v275 = vld [vmem:[%s250 + $0x90] sm:$0xff]
      %v276 = vld [vmem:[%s250 + $0x98] sm:$0xff]
      %v277 = vld [vmem:[%s250 + $0xa0] sm:$0xff]
      %v278 = vld [vmem:[%s250 + $0xa8] sm:$0xff]
      %v279 = vld [vmem:[%s250 + $0xb0] sm:$0xff]
      %v280 = vld [vmem:[%s250 + $0xb8] sm:$0xff]
      %v281 = vld [vmem:[%s250 + $0xc0] sm:$0xff]
      %v282 = vld [vmem:[%s250 + $0xc8] sm:$0xff]
      %v283 = vld [vmem:[%s250 + $0xd0] sm:$0xff]
      %v284 = vld [vmem:[%s250 + $0xd8] sm:$0xff]
      %v285 = vld [vmem:[%s250 + $0xe0] sm:$0xff]
      %v286 = vld [vmem:[%s250 + $0xe8] sm:$0xff]
      %v287 = vld [vmem:[%s250 + $0xf0] sm:$0xff]
      %v288 = vld [vmem:[%s250 + $0xf8] sm:$0xff]
      %v289 = vld [vmem:[%s2] sm:$0xf]
      %v290 = vld [vmem:[%s3] sm:$0x1]
      %v292 = vlaneseq
      %v293 = vshrl.u32 %v292, 7
      %v294 = vsub.s32 0, %v293
      %v295 = vrot.slane %v290, %v294
      %vm297 = vcmask 31744
      %v299 = vsel %vm297, %v257, 0
      %v302 = vsel %vm297, %v258, 0
      %v305 = vsel %vm297, %v259, 0
      %v308 = vsel %vm297, %v260, 0
      %v311 = vsel %vm297, %v261, 0
      %v314 = vsel %vm297, %v262, 0
      %v317 = vsel %vm297, %v263, 0
      %v320 = vsel %vm297, %v264, 0
      %v323 = vsel %vm297, %v265, 0
      %v326 = vsel %vm297, %v266, 0
      %v329 = vsel %vm297, %v267, 0
      %v332 = vsel %vm297, %v268, 0
      %v335 = vsel %vm297, %v269, 0
      %v338 = vsel %vm297, %v270, 0
      %v341 = vsel %vm297, %v271, 0
      %v344 = vsel %vm297, %v272, 0
      %v347 = vsel %vm297, %v273, 0
      %v350 = vsel %vm297, %v274, 0
      %v353 = vsel %vm297, %v275, 0
      %v356 = vsel %vm297, %v276, 0
      %v359 = vsel %vm297, %v277, 0
      %v362 = vsel %vm297, %v278, 0
      %v365 = vsel %vm297, %v279, 0
      %v368 = vsel %vm297, %v280, 0
      %v371 = vsel %vm297, %v281, 0
      %v374 = vsel %vm297, %v282, 0
      %v377 = vsel %vm297, %v283, 0
      %v380 = vsel %vm297, %v284, 0
      %v383 = vsel %vm297, %v285, 0
      %v386 = vsel %vm297, %v286, 0
      %v389 = vsel %vm297, %v287, 0
      %v392 = vsel %vm297, %v288, 0
      %vm394 = vcmask 1043456
      %v396 = vsel %vm394, %v289, 0
      %398 = vmatprep.subr.mxu0 0.0
      %399 = vmatpush1.msra.mxu0 0.0
      %400 = vmatprep.subr.mxu0 0.0
      %401 = vmatpush1.msra.mxu0 0.0
      %402 = vmatprep.subr.mxu0 0.0
      %403 = vmatpush1.msra.mxu0 0.0
      %404 = vmatprep.subr.mxu0 0.0
      %405 = vmatpush1.msra.mxu0 0.0
      %406 = vmatprep.subr.mxu0 0.0
      %407 = vmatpush1.msra.mxu0 0.0
      %408 = vmatprep.subr.mxu0 0.0
      %409 = vmatpush1.msra.mxu0 0.0
      %410 = vmatprep.subr.mxu0 0.0
      %411 = vmatpush1.msra.mxu0 0.0
      %412 = vmatprep.subr.mxu0 0.0
      %413 = vmatpush1.msra.mxu0 0.0
      %414 = vmatprep.subr.mxu0 0.0
      %415 = vmatpush1.msra.mxu0 0.0
      %416 = vmatprep.subr.mxu0 0.0
      %417 = vmatpush1.msra.mxu0 0.0
      %418 = vmatprep.subr.mxu0 0.0
      %419 = vmatpush1.msra.mxu0 0.0
      %420 = vmatprep.subr.mxu0 0.0
      %421 = vmatpush1.msra.mxu0 0.0
      %422 = vmatprep.subr.mxu0 0.0
      %423 = vmatpush1.msra.mxu0 0.0
      %424 = vmatprep.subr.mxu0 0.0
      %425 = vmatpush1.msra.mxu0 0.0
      %426 = vmatprep.subr.mxu0 0.0
      %427 = vmatpush1.msra.mxu0 0.0
      %428 = vmatprep.subr.mxu0 0.0
      %429 = vmatpush1.msra.mxu0 %v396
      %430 = vmatprep.subr.mxu0 0.0
      %431 = vmatpush2.msra.mxu0 0.0
      %432 = vmatprep.subr.mxu0 0.0
      %433 = vmatpush2.msra.mxu0 0.0
      %434 = vmatprep.subr.mxu0 0.0
      %435 = vmatpush2.msra.mxu0 0.0
      %436 = vmatprep.subr.mxu0 0.0
      %437 = vmatpush2.msra.mxu0 0.0
      %438 = vmatprep.subr.mxu0 0.0
      %439 = vmatpush2.msra.mxu0 0.0
      %440 = vmatprep.subr.mxu0 0.0
      %441 = vmatpush2.msra.mxu0 0.0
      %442 = vmatprep.subr.mxu0 0.0
      %443 = vmatpush2.msra.mxu0 0.0
      %444 = vmatprep.subr.mxu0 0.0
      %445 = vmatpush2.msra.mxu0 0.0
      %446 = vmatprep.subr.mxu0 0.0
      %447 = vmatpush2.msra.mxu0 0.0
      %448 = vmatprep.subr.mxu0 0.0
      %449 = vmatpush2.msra.mxu0 0.0
      %450 = vmatprep.subr.mxu0 0.0
      %451 = vmatpush2.msra.mxu0 0.0
      %452 = vmatprep.subr.mxu0 0.0
      %453 = vmatpush2.msra.mxu0 0.0
      %454 = vmatprep.subr.mxu0 0.0
      %455 = vmatpush2.msra.mxu0 0.0
      %456 = vmatprep.subr.mxu0 0.0
      %457 = vmatpush2.msra.mxu0 0.0
      %458 = vmatprep.subr.mxu0 0.0
      %459 = vmatpush2.msra.mxu0 0.0
      %460 = vmatprep.subr.mxu0 0.0
      %461 = vmatpush2.msra.mxu0 0.0
      %462 = vmatprep.mubr.f32.mxu0 0.0
      %463 = vmatmul.mubr.f32.gmra.mxu0 %v299
      %v464 = vpop.f32.mrf.mxu0
      %v465 = vadd.f32 %v295, %v464
      %v466 = vpop.f32.mrf.mxu0
      %467 = vmatprep.mubr.f32.mxu0 0.0
      %468 = vmatmul.mubr.f32.gmra.mxu0 %v302
      %v469 = vpop.f32.mrf.mxu0
      %v470 = vadd.f32 %v295, %v469
      %v471 = vpop.f32.mrf.mxu0
      %472 = vmatprep.mubr.f32.mxu0 0.0
      %473 = vmatmul.mubr.f32.gmra.mxu0 %v305
      %v474 = vpop.f32.mrf.mxu0
      %v475 = vadd.f32 %v295, %v474
      %v476 = vpop.f32.mrf.mxu0
      %477 = vmatprep.mubr.f32.mxu0 0.0
      %478 = vmatmul.mubr.f32.gmra.mxu0 %v308
      %v479 = vpop.f32.mrf.mxu0
      %v480 = vadd.f32 %v295, %v479
      %v481 = vpop.f32.mrf.mxu0
      %482 = vmatprep.mubr.f32.mxu0 0.0
      %483 = vmatmul.mubr.f32.gmra.mxu0 %v311
      %v484 = vpop.f32.mrf.mxu0
      %v485 = vadd.f32 %v295, %v484
      %v486 = vpop.f32.mrf.mxu0
      %487 = vmatprep.mubr.f32.mxu0 0.0
      %488 = vmatmul.mubr.f32.gmra.mxu0 %v314
      %v489 = vpop.f32.mrf.mxu0
      %v490 = vadd.f32 %v295, %v489
      %v491 = vpop.f32.mrf.mxu0
      %492 = vmatprep.mubr.f32.mxu0 0.0
      %493 = vmatmul.mubr.f32.gmra.mxu0 %v317
      %v494 = vpop.f32.mrf.mxu0
      %v495 = vadd.f32 %v295, %v494
      %v496 = vpop.f32.mrf.mxu0
      %497 = vmatprep.mubr.f32.mxu0 0.0
      %498 = vmatmul.mubr.f32.gmra.mxu0 %v320
      %v499 = vpop.f32.mrf.mxu0
      %v500 = vadd.f32 %v295, %v499
      %v501 = vpop.f32.mrf.mxu0
      %502 = vmatprep.mubr.f32.mxu0 0.0
      %503 = vmatmul.mubr.f32.gmra.mxu0 %v323
      %v504 = vpop.f32.mrf.mxu0
      %v505 = vadd.f32 %v295, %v504
      %v506 = vpop.f32.mrf.mxu0
      %507 = vmatprep.mubr.f32.mxu0 0.0
      %508 = vmatmul.mubr.f32.gmra.mxu0 %v326
      %v509 = vpop.f32.mrf.mxu0
      %v510 = vadd.f32 %v295, %v509
      %v511 = vpop.f32.mrf.mxu0
      %512 = vmatprep.mubr.f32.mxu0 0.0
      %513 = vmatmul.mubr.f32.gmra.mxu0 %v329
      %v514 = vpop.f32.mrf.mxu0
      %v515 = vadd.f32 %v295, %v514
      %v516 = vpop.f32.mrf.mxu0
      %517 = vmatprep.mubr.f32.mxu0 0.0
      %518 = vmatmul.mubr.f32.gmra.mxu0 %v332
      %v519 = vpop.f32.mrf.mxu0
      %v520 = vadd.f32 %v295, %v519
      %v521 = vpop.f32.mrf.mxu0
      %522 = vmatprep.mubr.f32.mxu0 0.0
      %523 = vmatmul.mubr.f32.gmra.mxu0 %v335
      %v524 = vpop.f32.mrf.mxu0
      %v525 = vadd.f32 %v295, %v524
      %v526 = vpop.f32.mrf.mxu0
      %527 = vmatprep.mubr.f32.mxu0 0.0
      %528 = vmatmul.mubr.f32.gmra.mxu0 %v338
      %v529 = vpop.f32.mrf.mxu0
      %v530 = vadd.f32 %v295, %v529
      %v531 = vpop.f32.mrf.mxu0
      %532 = vmatprep.mubr.f32.mxu0 0.0
      %533 = vmatmul.mubr.f32.gmra.mxu0 %v341
      %v534 = vpop.f32.mrf.mxu0
      %v535 = vadd.f32 %v295, %v534
      %v536 = vpop.f32.mrf.mxu0
      %537 = vmatprep.mubr.f32.mxu0 0.0
      %538 = vmatmul.mubr.f32.gmra.mxu0 %v344
      %v539 = vpop.f32.mrf.mxu0
      %v540 = vadd.f32 %v295, %v539
      %v541 = vpop.f32.mrf.mxu0
      %542 = vmatprep.mubr.f32.mxu0 0.0
      %543 = vmatmul.mubr.f32.gmra.mxu0 %v347
      %v544 = vpop.f32.mrf.mxu0
      %v545 = vadd.f32 %v295, %v544
      %v546 = vpop.f32.mrf.mxu0
      %547 = vmatprep.mubr.f32.mxu0 0.0
      %548 = vmatmul.mubr.f32.gmra.mxu0 %v350
      %v549 = vpop.f32.mrf.mxu0
      %v550 = vadd.f32 %v295, %v549
      %v551 = vpop.f32.mrf.mxu0
      %552 = vmatprep.mubr.f32.mxu0 0.0
      %553 = vmatmul.mubr.f32.gmra.mxu0 %v353
      %v554 = vpop.f32.mrf.mxu0
      %v555 = vadd.f32 %v295, %v554
      %v556 = vpop.f32.mrf.mxu0
      %557 = vmatprep.mubr.f32.mxu0 0.0
      %558 = vmatmul.mubr.f32.gmra.mxu0 %v356
      %v559 = vpop.f32.mrf.mxu0
      %v560 = vadd.f32 %v295, %v559
      %v561 = vpop.f32.mrf.mxu0
      %562 = vmatprep.mubr.f32.mxu0 0.0
      %563 = vmatmul.mubr.f32.gmra.mxu0 %v359
      %v564 = vpop.f32.mrf.mxu0
      %v565 = vadd.f32 %v295, %v564
      %v566 = vpop.f32.mrf.mxu0
      %567 = vmatprep.mubr.f32.mxu0 0.0
      %568 = vmatmul.mubr.f32.gmra.mxu0 %v362
      %v569 = vpop.f32.mrf.mxu0
      %v570 = vadd.f32 %v295, %v569
      %v571 = vpop.f32.mrf.mxu0
      %572 = vmatprep.mubr.f32.mxu0 0.0
      %573 = vmatmul.mubr.f32.gmra.mxu0 %v365
      %v574 = vpop.f32.mrf.mxu0
      %v575 = vadd.f32 %v295, %v574
      %v576 = vpop.f32.mrf.mxu0
      %577 = vmatprep.mubr.f32.mxu0 0.0
      %578 = vmatmul.mubr.f32.gmra.mxu0 %v368
      %v579 = vpop.f32.mrf.mxu0
      %v580 = vpop.f32.mrf.mxu0
      %581 = vmatprep.mubr.f32.mxu0 0.0
      %582 = vmatmul.mubr.f32.gmra.mxu0 %v371
      %v583 = vpop.f32.mrf.mxu0
      %v584 = vadd.f32 %v295, %v583
      %v585 = vpop.f32.mrf.mxu0
      %586 = vmatprep.mubr.f32.mxu0 0.0
      %587 = vmatmul.mubr.f32.gmra.mxu0 %v374
      %v588 = vpop.f32.mrf.mxu0
      %v589 = vadd.f32 %v295, %v588
      %v590 = vpop.f32.mrf.mxu0
      %591 = vmatprep.mubr.f32.mxu0 0.0
      %592 = vmatmul.mubr.f32.gmra.mxu0 %v377
      %v593 = vpop.f32.mrf.mxu0
      %v594 = vadd.f32 %v295, %v593
      %v595 = vpop.f32.mrf.mxu0
      %596 = vmatprep.mubr.f32.mxu0 0.0
      %597 = vmatmul.mubr.f32.gmra.mxu0 %v380
      %v598 = vpop.f32.mrf.mxu0
      %v599 = vadd.f32 %v295, %v598
      %v600 = vpop.f32.mrf.mxu0
      %601 = vmatprep.mubr.f32.mxu0 0.0
      %602 = vmatmul.mubr.f32.gmra.mxu0 %v383
      %v603 = vpop.f32.mrf.mxu0
      %v604 = vadd.f32 %v295, %v603
      %v605 = vpop.f32.mrf.mxu0
      %606 = vmatprep.mubr.f32.mxu0 0.0
      %607 = vmatmul.mubr.f32.gmra.mxu0 %v386
      %v608 = vpop.f32.mrf.mxu0
      %v609 = vadd.f32 %v295, %v608
      %v610 = vpop.f32.mrf.mxu0
      %611 = vmatprep.mubr.f32.mxu0 0.0
      %612 = vmatmul.mubr.f32.gmra.mxu0 %v389
      %v613 = vpop.f32.mrf.mxu0
      %v614 = vadd.f32 %v295, %v613
      %v615 = vpop.f32.mrf.mxu0
      %616 = vmatprep.mubr.f32.mxu0 0.0
      %617 = vmatmul.mubr.f32.gmra.mxu0 %v392
      %v618 = vpop.f32.mrf.mxu0
      %v619 = vpop.f32.mrf.mxu0
      %620 = vdwg.mxu0
      %v621 = vmax.f32 %v465, 0.0
      %v622 = vmax.f32 %v470, 0.0
      %v623 = vmax.f32 %v475, 0.0
      %v624 = vmax.f32 %v480, 0.0
      %v625 = vmax.f32 %v485, 0.0
      %v626 = vmax.f32 %v490, 0.0
      %v627 = vmax.f32 %v495, 0.0
      %v628 = vmax.f32 %v500, 0.0
      %v629 = vmax.f32 %v505, 0.0
      %v630 = vmax.f32 %v510, 0.0
      %v631 = vmax.f32 %v515, 0.0
      %v632 = vmax.f32 %v520, 0.0
      %v633 = vmax.f32 %v525, 0.0
      %v634 = vmax.f32 %v530, 0.0
      %v635 = vmax.f32 %v535, 0.0
      %v636 = vmax.f32 %v540, 0.0
      %v637 = vmax.f32 %v545, 0.0
      %v638 = vmax.f32 %v550, 0.0
      %v639 = vmax.f32 %v555, 0.0
      %v640 = vmax.f32 %v560, 0.0
      %v641 = vmax.f32 %v565, 0.0
      %v642 = vmax.f32 %v570, 0.0
      %v643 = vmax.f32 %v575, 0.0
      %v644 = vmax.f32 %v584, 0.0
      %v645 = vmax.f32 %v589, 0.0
      %v646 = vmax.f32 %v594, 0.0
      %v647 = vmax.f32 %v599, 0.0
      %v648 = vmax.f32 %v604, 0.0
      %v649 = vmax.f32 %v609, 0.0
      %v650 = vmax.f32 %v614, 0.0
      %v651 = vld [vmem:[%s1] sm:$0x7]
      %v652 = vld [vmem:[%s1 + $0x4] sm:$0x7]
      %v653 = vld [vmem:[%s1 + $0x8] sm:$0x7]
      %v654 = vld [vmem:[%s1 + $0xc] sm:$0x7]
      %v655 = vld [vmem:[%s1 + $0x10] sm:$0x7]
      %v656 = vld [vmem:[%s1 + $0x14] sm:$0x7]
      %v657 = vlaneseq
      %v658 = vshrl.u32 %v657, 7
      %v659 = vsub.s32 0, %v658
      %v660 = vrot.slane %v651, %v659
      %v661 = vmul.f32 %v257, %v660
      %v662 = vmul.f32 %v258, %v660
      %v663 = vmul.f32 %v259, %v660
      %v664 = vmul.f32 %v260, %v660
      %v665 = vmul.f32 %v261, %v660
      %v666 = vmul.f32 %v262, %v660
      %v667 = vmul.f32 %v263, %v660
      %v668 = vlaneseq
      %v669 = vshrl.u32 %v668, 7
      %v670 = vsub.s32 1, %v669
      %v671 = vrot.slane %v651, %v670
      %v672 = vmul.f32 %v265, %v671
      %v673 = vmul.f32 %v266, %v671
      %v674 = vmul.f32 %v267, %v671
      %v675 = vmul.f32 %v268, %v671
      %v676 = vmul.f32 %v269, %v671
      %v677 = vmul.f32 %v270, %v671
      %v678 = vmul.f32 %v271, %v671
      %v679 = vadd.f32 %v661, %v672
      %v680 = vadd.f32 %v662, %v673
      %v681 = vadd.f32 %v663, %v674
      %v682 = vadd.f32 %v664, %v675
      %v683 = vadd.f32 %v665, %v676
      %v684 = vadd.f32 %v666, %v677
      %v685 = vadd.f32 %v667, %v678
      %v686 = vlaneseq
      %v687 = vshrl.u32 %v686, 7
      %v688 = vsub.s32 2, %v687
      %v689 = vrot.slane %v651, %v688
      %v690 = vmul.f32 %v257, %v689
      %v691 = vmul.f32 %v258, %v689
      %v692 = vmul.f32 %v259, %v689
      %v693 = vmul.f32 %v260, %v689
      %v694 = vmul.f32 %v261, %v689
      %v695 = vmul.f32 %v262, %v689
      %v696 = vmul.f32 %v263, %v689
      %v704 = vrot.slane %v690, 1
      %v705 = vrot.slane %v691, 1
      %v706 = vrot.slane %v692, 1
      %v707 = vrot.slane %v693, 1
      %v708 = vrot.slane %v694, 1
      %v709 = vrot.slane %v695, 1
      %v710 = vrot.slane %v696, 1
      %v718 = vadd.f32 %v679, %v704
      %v719 = vadd.f32 %v680, %v705
      %v720 = vadd.f32 %v681, %v706
      %v721 = vadd.f32 %v682, %v707
      %v722 = vadd.f32 %v683, %v708
      %v723 = vadd.f32 %v684, %v709
      %v724 = vadd.f32 %v685, %v710
      %v725 = vlaneseq
      %v726 = vshrl.u32 %v725, 7
      %v727 = vsub.s32 0, %v726
      %v728 = vrot.slane %v652, %v727
      %v729 = vmul.f32 %v273, %v728
      %v730 = vmul.f32 %v274, %v728
      %v731 = vmul.f32 %v275, %v728
      %v732 = vmul.f32 %v276, %v728
      %v733 = vmul.f32 %v277, %v728
      %v734 = vmul.f32 %v278, %v728
      %v735 = vmul.f32 %v279, %v728
      %v736 = vadd.f32 %v718, %v729
      %v737 = vadd.f32 %v719, %v730
      %v738 = vadd.f32 %v720, %v731
      %v739 = vadd.f32 %v721, %v732
      %v740 = vadd.f32 %v722, %v733
      %v741 = vadd.f32 %v723, %v734
      %v742 = vadd.f32 %v724, %v735
      %v743 = vlaneseq
      %v744 = vshrl.u32 %v743, 7
      %v745 = vsub.s32 1, %v744
      %v746 = vrot.slane %v652, %v745
      %v747 = vmul.f32 %v281, %v746
      %v748 = vmul.f32 %v282, %v746
      %v749 = vmul.f32 %v283, %v746
      %v750 = vmul.f32 %v284, %v746
      %v751 = vmul.f32 %v285, %v746
      %v752 = vmul.f32 %v286, %v746
      %v753 = vmul.f32 %v287, %v746
      %v754 = vadd.f32 %v736, %v747
      %v755 = vadd.f32 %v737, %v748
      %v756 = vadd.f32 %v738, %v749
      %v757 = vadd.f32 %v739, %v750
      %v758 = vadd.f32 %v740, %v751
      %v759 = vadd.f32 %v741, %v752
      %v760 = vadd.f32 %v742, %v753
      %v761 = vlaneseq
      %v762 = vshrl.u32 %v761, 7
      %v763 = vsub.s32 2, %v762
      %v764 = vrot.slane %v652, %v763
      %v765 = vmul.f32 %v273, %v764
      %v766 = vmul.f32 %v274, %v764
      %v767 = vmul.f32 %v275, %v764
      %v768 = vmul.f32 %v276, %v764
      %v769 = vmul.f32 %v277, %v764
      %v770 = vmul.f32 %v278, %v764
      %v771 = vmul.f32 %v279, %v764
      %v779 = vrot.slane %v765, 1
      %v780 = vrot.slane %v766, 1
      %v781 = vrot.slane %v767, 1
      %v782 = vrot.slane %v768, 1
      %v783 = vrot.slane %v769, 1
      %v784 = vrot.slane %v770, 1
      %v785 = vrot.slane %v771, 1
      %v793 = vadd.f32 %v754, %v779
      %v794 = vadd.f32 %v755, %v780
      %v795 = vadd.f32 %v756, %v781
      %v796 = vadd.f32 %v757, %v782
      %v797 = vadd.f32 %v758, %v783
      %v798 = vadd.f32 %v759, %v784
      %v799 = vadd.f32 %v760, %v785
      %v800 = vlaneseq
      %v801 = vshrl.u32 %v800, 7
      %v802 = vsub.s32 0, %v801
      %v803 = vrot.slane %v653, %v802
      %v804 = vmul.f32 %v258, %v803
      %v805 = vmul.f32 %v259, %v803
      %v806 = vmul.f32 %v260, %v803
      %v807 = vmul.f32 %v261, %v803
      %v808 = vmul.f32 %v262, %v803
      %v809 = vmul.f32 %v263, %v803
      %v810 = vmul.f32 %v264, %v803
      %v811 = vadd.f32 %v793, %v804
      %v812 = vadd.f32 %v794, %v805
      %v813 = vadd.f32 %v795, %v806
      %v814 = vadd.f32 %v796, %v807
      %v815 = vadd.f32 %v797, %v808
      %v816 = vadd.f32 %v798, %v809
      %v817 = vadd.f32 %v799, %v810
      %v818 = vlaneseq
      %v819 = vshrl.u32 %v818, 7
      %v820 = vsub.s32 1, %v819
      %v821 = vrot.slane %v653, %v820
      %v822 = vmul.f32 %v266, %v821
      %v823 = vmul.f32 %v267, %v821
      %v824 = vmul.f32 %v268, %v821
      %v825 = vmul.f32 %v269, %v821
      %v826 = vmul.f32 %v270, %v821
      %v827 = vmul.f32 %v271, %v821
      %v828 = vmul.f32 %v272, %v821
      %v829 = vadd.f32 %v811, %v822
      %v830 = vadd.f32 %v812, %v823
      %v831 = vadd.f32 %v813, %v824
      %v832 = vadd.f32 %v814, %v825
      %v833 = vadd.f32 %v815, %v826
      %v834 = vadd.f32 %v816, %v827
      %v835 = vadd.f32 %v817, %v828
      %v836 = vlaneseq
      %v837 = vshrl.u32 %v836, 7
      %v838 = vsub.s32 2, %v837
      %v839 = vrot.slane %v653, %v838
      %v840 = vmul.f32 %v258, %v839
      %v841 = vmul.f32 %v259, %v839
      %v842 = vmul.f32 %v260, %v839
      %v843 = vmul.f32 %v261, %v839
      %v844 = vmul.f32 %v262, %v839
      %v845 = vmul.f32 %v263, %v839
      %v846 = vmul.f32 %v264, %v839
      %v854 = vrot.slane %v840, 1
      %v855 = vrot.slane %v841, 1
      %v856 = vrot.slane %v842, 1
      %v857 = vrot.slane %v843, 1
      %v858 = vrot.slane %v844, 1
      %v859 = vrot.slane %v845, 1
      %v860 = vrot.slane %v846, 1
      %v868 = vadd.f32 %v829, %v854
      %v869 = vadd.f32 %v830, %v855
      %v870 = vadd.f32 %v831, %v856
      %v871 = vadd.f32 %v832, %v857
      %v872 = vadd.f32 %v833, %v858
      %v873 = vadd.f32 %v834, %v859
      %v874 = vadd.f32 %v835, %v860
      %v882 = vcombine.high %v868, %v868
      %v884 = vunpack.c.l.s4 1966171168
      %v885 = vunpack.c.0.s8 %v884
      %v886 = vlaneseq
      %v887 = vshrl.u32 %v886, 7
      %v888 = vsub.s32 %v885, %v887
      %v889 = vrot.slane %v868, %v888
      %v891 = vunpack.c.l.s4 1966171168
      %v892 = vunpack.c.0.s8 %v891
      %v893 = vlaneseq
      %v894 = vshrl.u32 %v893, 7
      %v895 = vsub.s32 %v892, %v894
      %v896 = vrot.slane %v882, %v895
      %v897 = vcombine.high %v889, %v889
      %v898 = vcombine.high %v896, %v896
      %v900 = vunpack.c.l.s4 1966171168
      %v901 = vunpack.c.0.s8 %v900
      %v902 = vlaneseq
      %v903 = vshrl.u32 %v902, 7
      %v904 = vsub.s32 %v901, %v903
      %v905 = vrot.slane %v889, %v904
      %v907 = vunpack.c.l.s4 1966171168
      %v908 = vunpack.c.0.s8 %v907
      %v909 = vlaneseq
      %v910 = vshrl.u32 %v909, 7
      %v911 = vsub.s32 %v908, %v910
      %v912 = vrot.slane %v896, %v911
      %v914 = vunpack.c.l.s4 1966171168
      %v915 = vunpack.c.0.s8 %v914
      %v916 = vlaneseq
      %v917 = vshrl.u32 %v916, 7
      %v918 = vsub.s32 %v915, %v917
      %v919 = vrot.slane %v897, %v918
      %v921 = vunpack.c.l.s4 1966171168
      %v922 = vunpack.c.0.s8 %v921
      %v923 = vlaneseq
      %v924 = vshrl.u32 %v923, 7
      %v925 = vsub.s32 %v922, %v924
      %v926 = vrot.slane %v898, %v925
      %v927 = vcombine.high %v905, %v905
      %v928 = vcombine.high %v912, %v912
      %v929 = vcombine.high %v919, %v919
      %v930 = vcombine.high %v869, %v869
      %v932 = vunpack.c.l.s4 1966171168
      %v933 = vunpack.c.0.s8 %v932
      %v934 = vlaneseq
      %v935 = vshrl.u32 %v934, 7
      %v936 = vsub.s32 %v933, %v935
      %v937 = vrot.slane %v869, %v936
      %v939 = vunpack.c.l.s4 1966171168
      %v940 = vunpack.c.0.s8 %v939
      %v941 = vlaneseq
      %v942 = vshrl.u32 %v941, 7
      %v943 = vsub.s32 %v940, %v942
      %v944 = vrot.slane %v930, %v943
      %v945 = vcombine.high %v937, %v937
      %v946 = vcombine.high %v944, %v944
      %v948 = vunpack.c.l.s4 1966171168
      %v949 = vunpack.c.0.s8 %v948
      %v950 = vlaneseq
      %v951 = vshrl.u32 %v950, 7
      %v952 = vsub.s32 %v949, %v951
      %v953 = vrot.slane %v937, %v952
      %v955 = vunpack.c.l.s4 1966171168
      %v956 = vunpack.c.0.s8 %v955
      %v957 = vlaneseq
      %v958 = vshrl.u32 %v957, 7
      %v959 = vsub.s32 %v956, %v958
      %v960 = vrot.slane %v944, %v959
      %v962 = vunpack.c.l.s4 1966171168
      %v963 = vunpack.c.0.s8 %v962
      %v964 = vlaneseq
      %v965 = vshrl.u32 %v964, 7
      %v966 = vsub.s32 %v963, %v965
      %v967 = vrot.slane %v945, %v966
      %v969 = vunpack.c.l.s4 1966171168
      %v970 = vunpack.c.0.s8 %v969
      %v971 = vlaneseq
      %v972 = vshrl.u32 %v971, 7
      %v973 = vsub.s32 %v970, %v972
      %v974 = vrot.slane %v946, %v973
      %v975 = vcombine.high %v953, %v953
      %v976 = vcombine.high %v960, %v960
      %v977 = vcombine.high %v967, %v967
      %v978 = vcombine.high %v870, %v870
      %v980 = vunpack.c.l.s4 1966171168
      %v981 = vunpack.c.0.s8 %v980
      %v982 = vlaneseq
      %v983 = vshrl.u32 %v982, 7
      %v984 = vsub.s32 %v981, %v983
      %v985 = vrot.slane %v870, %v984
      %v987 = vunpack.c.l.s4 1966171168
      %v988 = vunpack.c.0.s8 %v987
      %v989 = vlaneseq
      %v990 = vshrl.u32 %v989, 7
      %v991 = vsub.s32 %v988, %v990
      %v992 = vrot.slane %v978, %v991
      %v993 = vcombine.high %v985, %v985
      %v994 = vcombine.high %v992, %v992
      %v996 = vunpack.c.l.s4 1966171168
      %v997 = vunpack.c.0.s8 %v996
      %v998 = vlaneseq
      %v999 = vshrl.u32 %v998, 7
      %v1000 = vsub.s32 %v997, %v999
      %v1001 = vrot.slane %v985, %v1000
      %v1003 = vunpack.c.l.s4 1966171168
      %v1004 = vunpack.c.0.s8 %v1003
      %v1005 = vlaneseq
      %v1006 = vshrl.u32 %v1005, 7
      %v1007 = vsub.s32 %v1004, %v1006
      %v1008 = vrot.slane %v992, %v1007
      %v1010 = vunpack.c.l.s4 1966171168
      %v1011 = vunpack.c.0.s8 %v1010
      %v1012 = vlaneseq
      %v1013 = vshrl.u32 %v1012, 7
      %v1014 = vsub.s32 %v1011, %v1013
      %v1015 = vrot.slane %v993, %v1014
      %v1017 = vunpack.c.l.s4 1966171168
      %v1018 = vunpack.c.0.s8 %v1017
      %v1019 = vlaneseq
      %v1020 = vshrl.u32 %v1019, 7
      %v1021 = vsub.s32 %v1018, %v1020
      %v1022 = vrot.slane %v994, %v1021
      %v1023 = vcombine.high %v1001, %v1001
      %v1024 = vcombine.high %v1008, %v1008
      %v1025 = vcombine.high %v1015, %v1015
      %v1026 = vcombine.high %v871, %v871
      %v1028 = vunpack.c.l.s4 1966171168
      %v1029 = vunpack.c.0.s8 %v1028
      %v1030 = vlaneseq
      %v1031 = vshrl.u32 %v1030, 7
      %v1032 = vsub.s32 %v1029, %v1031
      %v1033 = vrot.slane %v871, %v1032
      %v1035 = vunpack.c.l.s4 1966171168
      %v1036 = vunpack.c.0.s8 %v1035
      %v1037 = vlaneseq
      %v1038 = vshrl.u32 %v1037, 7
      %v1039 = vsub.s32 %v1036, %v1038
      %v1040 = vrot.slane %v1026, %v1039
      %v1041 = vcombine.high %v1033, %v1033
      %v1042 = vcombine.high %v1040, %v1040
      %v1044 = vunpack.c.l.s4 1966171168
      %v1045 = vunpack.c.0.s8 %v1044
      %v1046 = vlaneseq
      %v1047 = vshrl.u32 %v1046, 7
      %v1048 = vsub.s32 %v1045, %v1047
      %v1049 = vrot.slane %v1033, %v1048
      %v1051 = vunpack.c.l.s4 1966171168
      %v1052 = vunpack.c.0.s8 %v1051
      %v1053 = vlaneseq
      %v1054 = vshrl.u32 %v1053, 7
      %v1055 = vsub.s32 %v1052, %v1054
      %v1056 = vrot.slane %v1040, %v1055
      %v1058 = vunpack.c.l.s4 1966171168
      %v1059 = vunpack.c.0.s8 %v1058
      %v1060 = vlaneseq
      %v1061 = vshrl.u32 %v1060, 7
      %v1062 = vsub.s32 %v1059, %v1061
      %v1063 = vrot.slane %v1041, %v1062
      %v1065 = vunpack.c.l.s4 1966171168
      %v1066 = vunpack.c.0.s8 %v1065
      %v1067 = vlaneseq
      %v1068 = vshrl.u32 %v1067, 7
      %v1069 = vsub.s32 %v1066, %v1068
      %v1070 = vrot.slane %v1042, %v1069
      %v1071 = vcombine.high %v1049, %v1049
      %v1072 = vcombine.high %v1056, %v1056
      %v1073 = vcombine.high %v1063, %v1063
      %v1074 = vcombine.high %v872, %v872
      %v1076 = vunpack.c.l.s4 1966171168
      %v1077 = vunpack.c.0.s8 %v1076
      %v1078 = vlaneseq
      %v1079 = vshrl.u32 %v1078, 7
      %v1080 = vsub.s32 %v1077, %v1079
      %v1081 = vrot.slane %v872, %v1080
      %v1083 = vunpack.c.l.s4 1966171168
      %v1084 = vunpack.c.0.s8 %v1083
      %v1085 = vlaneseq
      %v1086 = vshrl.u32 %v1085, 7
      %v1087 = vsub.s32 %v1084, %v1086
      %v1088 = vrot.slane %v1074, %v1087
      %v1089 = vcombine.high %v1081, %v1081
      %v1090 = vcombine.high %v1088, %v1088
      %v1092 = vunpack.c.l.s4 1966171168
      %v1093 = vunpack.c.0.s8 %v1092
      %v1094 = vlaneseq
      %v1095 = vshrl.u32 %v1094, 7
      %v1096 = vsub.s32 %v1093, %v1095
      %v1097 = vrot.slane %v1081, %v1096
      %v1099 = vunpack.c.l.s4 1966171168
      %v1100 = vunpack.c.0.s8 %v1099
      %v1101 = vlaneseq
      %v1102 = vshrl.u32 %v1101, 7
      %v1103 = vsub.s32 %v1100, %v1102
      %v1104 = vrot.slane %v1088, %v1103
      %v1106 = vunpack.c.l.s4 1966171168
      %v1107 = vunpack.c.0.s8 %v1106
      %v1108 = vlaneseq
      %v1109 = vshrl.u32 %v1108, 7
      %v1110 = vsub.s32 %v1107, %v1109
      %v1111 = vrot.slane %v1089, %v1110
      %v1113 = vunpack.c.l.s4 1966171168
      %v1114 = vunpack.c.0.s8 %v1113
      %v1115 = vlaneseq
      %v1116 = vshrl.u32 %v1115, 7
      %v1117 = vsub.s32 %v1114, %v1116
      %v1118 = vrot.slane %v1090, %v1117
      %v1119 = vcombine.high %v1097, %v1097
      %v1120 = vcombine.high %v1104, %v1104
      %v1121 = vcombine.high %v1111, %v1111
      %v1122 = vcombine.high %v873, %v873
      %v1124 = vunpack.c.l.s4 1966171168
      %v1125 = vunpack.c.0.s8 %v1124
      %v1126 = vlaneseq
      %v1127 = vshrl.u32 %v1126, 7
      %v1128 = vsub.s32 %v1125, %v1127
      %v1129 = vrot.slane %v873, %v1128
      %v1131 = vunpack.c.l.s4 1966171168
      %v1132 = vunpack.c.0.s8 %v1131
      %v1133 = vlaneseq
      %v1134 = vshrl.u32 %v1133, 7
      %v1135 = vsub.s32 %v1132, %v1134
      %v1136 = vrot.slane %v1122, %v1135
      %v1137 = vcombine.high %v1129, %v1129
      %v1138 = vcombine.high %v1136, %v1136
      %v1140 = vunpack.c.l.s4 1966171168
      %v1141 = vunpack.c.0.s8 %v1140
      %v1142 = vlaneseq
      %v1143 = vshrl.u32 %v1142, 7
      %v1144 = vsub.s32 %v1141, %v1143
      %v1145 = vrot.slane %v1129, %v1144
      %v1147 = vunpack.c.l.s4 1966171168
      %v1148 = vunpack.c.0.s8 %v1147
      %v1149 = vlaneseq
      %v1150 = vshrl.u32 %v1149, 7
      %v1151 = vsub.s32 %v1148, %v1150
      %v1152 = vrot.slane %v1136, %v1151
      %v1154 = vunpack.c.l.s4 1966171168
      %v1155 = vunpack.c.0.s8 %v1154
      %v1156 = vlaneseq
      %v1157 = vshrl.u32 %v1156, 7
      %v1158 = vsub.s32 %v1155, %v1157
      %v1159 = vrot.slane %v1137, %v1158
      %v1161 = vunpack.c.l.s4 1966171168
      %v1162 = vunpack.c.0.s8 %v1161
      %v1163 = vlaneseq
      %v1164 = vshrl.u32 %v1163, 7
      %v1165 = vsub.s32 %v1162, %v1164
      %v1166 = vrot.slane %v1138, %v1165
      %v1167 = vcombine.high %v1145, %v1145
      %v1168 = vcombine.high %v1152, %v1152
      %v1169 = vcombine.high %v1159, %v1159
      %v1170 = vcombine.high %v874, %v874
      %v1172 = vunpack.c.l.s4 1966171168
      %v1173 = vunpack.c.0.s8 %v1172
      %v1174 = vlaneseq
      %v1175 = vshrl.u32 %v1174, 7
      %v1176 = vsub.s32 %v1173, %v1175
      %v1177 = vrot.slane %v874, %v1176
      %v1179 = vunpack.c.l.s4 1966171168
      %v1180 = vunpack.c.0.s8 %v1179
      %v1181 = vlaneseq
      %v1182 = vshrl.u32 %v1181, 7
      %v1183 = vsub.s32 %v1180, %v1182
      %v1184 = vrot.slane %v1170, %v1183
      %v1185 = vcombine.high %v1177, %v1177
      %v1186 = vcombine.high %v1184, %v1184
      %v1188 = vunpack.c.l.s4 1966171168
      %v1189 = vunpack.c.0.s8 %v1188
      %v1190 = vlaneseq
      %v1191 = vshrl.u32 %v1190, 7
      %v1192 = vsub.s32 %v1189, %v1191
      %v1193 = vrot.slane %v1177, %v1192
      %v1195 = vunpack.c.l.s4 1966171168
      %v1196 = vunpack.c.0.s8 %v1195
      %v1197 = vlaneseq
      %v1198 = vshrl.u32 %v1197, 7
      %v1199 = vsub.s32 %v1196, %v1198
      %v1200 = vrot.slane %v1184, %v1199
      %v1202 = vunpack.c.l.s4 1966171168
      %v1203 = vunpack.c.0.s8 %v1202
      %v1204 = vlaneseq
      %v1205 = vshrl.u32 %v1204, 7
      %v1206 = vsub.s32 %v1203, %v1205
      %v1207 = vrot.slane %v1185, %v1206
      %v1209 = vunpack.c.l.s4 1966171168
      %v1210 = vunpack.c.0.s8 %v1209
      %v1211 = vlaneseq
      %v1212 = vshrl.u32 %v1211, 7
      %v1213 = vsub.s32 %v1210, %v1212
      %v1214 = vrot.slane %v1186, %v1213
      %v1215 = vcombine.high %v1193, %v1193
      %v1216 = vcombine.high %v1200, %v1200
      %v1217 = vcombine.high %v1207, %v1207
      %v1218 = vlaneseq
      %v1219 = vshrl.u32 %v1218, 7
      %v1220 = vsub.s32 0, %v1219
      %v1221 = vrot.slane %v654, %v1220
      %v1222 = vmul.f32 %v621, %v1221
      %v1223 = vmul.f32 %v622, %v1221
      %v1224 = vmul.f32 %v623, %v1221
      %v1225 = vmul.f32 %v624, %v1221
      %v1226 = vmul.f32 %v625, %v1221
      %v1227 = vmul.f32 %v626, %v1221
      %v1228 = vmul.f32 %v627, %v1221
      %v1229 = vlaneseq
      %v1230 = vshrl.u32 %v1229, 7
      %v1231 = vsub.s32 1, %v1230
      %v1232 = vrot.slane %v654, %v1231
      %v1233 = vmul.f32 %v629, %v1232
      %v1234 = vmul.f32 %v630, %v1232
      %v1235 = vmul.f32 %v631, %v1232
      %v1236 = vmul.f32 %v632, %v1232
      %v1237 = vmul.f32 %v633, %v1232
      %v1238 = vmul.f32 %v634, %v1232
      %v1239 = vmul.f32 %v635, %v1232
      %v1240 = vadd.f32 %v1222, %v1233
      %v1241 = vadd.f32 %v1223, %v1234
      %v1242 = vadd.f32 %v1224, %v1235
      %v1243 = vadd.f32 %v1225, %v1236
      %v1244 = vadd.f32 %v1226, %v1237
      %v1245 = vadd.f32 %v1227, %v1238
      %v1246 = vadd.f32 %v1228, %v1239
      %v1247 = vlaneseq
      %v1248 = vshrl.u32 %v1247, 7
      %v1249 = vsub.s32 2, %v1248
      %v1250 = vrot.slane %v654, %v1249
      %v1251 = vmul.f32 %v621, %v1250
      %v1252 = vmul.f32 %v622, %v1250
      %v1253 = vmul.f32 %v623, %v1250
      %v1254 = vmul.f32 %v624, %v1250
      %v1255 = vmul.f32 %v625, %v1250
      %v1256 = vmul.f32 %v626, %v1250
      %v1257 = vmul.f32 %v627, %v1250
      %v1265 = vrot.slane %v1251, 1
      %v1266 = vrot.slane %v1252, 1
      %v1267 = vrot.slane %v1253, 1
      %v1268 = vrot.slane %v1254, 1
      %v1269 = vrot.slane %v1255, 1
      %v1270 = vrot.slane %v1256, 1
      %v1271 = vrot.slane %v1257, 1
      %v1279 = vadd.f32 %v1240, %v1265
      %v1280 = vadd.f32 %v1241, %v1266
      %v1281 = vadd.f32 %v1242, %v1267
      %v1282 = vadd.f32 %v1243, %v1268
      %v1283 = vadd.f32 %v1244, %v1269
      %v1284 = vadd.f32 %v1245, %v1270
      %v1285 = vadd.f32 %v1246, %v1271
      %v1286 = vlaneseq
      %v1287 = vshrl.u32 %v1286, 7
      %v1288 = vsub.s32 0, %v1287
      %v1289 = vrot.slane %v655, %v1288
      %v1290 = vmul.f32 %v637, %v1289
      %v1291 = vmul.f32 %v638, %v1289
      %v1292 = vmul.f32 %v639, %v1289
      %v1293 = vmul.f32 %v640, %v1289
      %v1294 = vmul.f32 %v641, %v1289
      %v1295 = vmul.f32 %v642, %v1289
      %v1296 = vmul.f32 %v643, %v1289
      %v1297 = vadd.f32 %v1279, %v1290
      %v1298 = vadd.f32 %v1280, %v1291
      %v1299 = vadd.f32 %v1281, %v1292
      %v1300 = vadd.f32 %v1282, %v1293
      %v1301 = vadd.f32 %v1283, %v1294
      %v1302 = vadd.f32 %v1284, %v1295
      %v1303 = vadd.f32 %v1285, %v1296
      %v1304 = vlaneseq
      %v1305 = vshrl.u32 %v1304, 7
      %v1306 = vsub.s32 1, %v1305
      %v1307 = vrot.slane %v655, %v1306
      %v1308 = vmul.f32 %v644, %v1307
      %v1309 = vmul.f32 %v645, %v1307
      %v1310 = vmul.f32 %v646, %v1307
      %v1311 = vmul.f32 %v647, %v1307
      %v1312 = vmul.f32 %v648, %v1307
      %v1313 = vmul.f32 %v649, %v1307
      %v1314 = vmul.f32 %v650, %v1307
      %v1315 = vadd.f32 %v1297, %v1308
      %v1316 = vadd.f32 %v1298, %v1309
      %v1317 = vadd.f32 %v1299, %v1310
      %v1318 = vadd.f32 %v1300, %v1311
      %v1319 = vadd.f32 %v1301, %v1312
      %v1320 = vadd.f32 %v1302, %v1313
      %v1321 = vadd.f32 %v1303, %v1314
      %v1322 = vlaneseq
      %v1323 = vshrl.u32 %v1322, 7
      %v1324 = vsub.s32 2, %v1323
      %v1325 = vrot.slane %v655, %v1324
      %v1326 = vmul.f32 %v637, %v1325
      %v1327 = vmul.f32 %v638, %v1325
      %v1328 = vmul.f32 %v639, %v1325
      %v1329 = vmul.f32 %v640, %v1325
      %v1330 = vmul.f32 %v641, %v1325
      %v1331 = vmul.f32 %v642, %v1325
      %v1332 = vmul.f32 %v643, %v1325
      %v1340 = vrot.slane %v1326, 1
      %v1341 = vrot.slane %v1327, 1
      %v1342 = vrot.slane %v1328, 1
      %v1343 = vrot.slane %v1329, 1
      %v1344 = vrot.slane %v1330, 1
      %v1345 = vrot.slane %v1331, 1
      %v1346 = vrot.slane %v1332, 1
      %v1354 = vadd.f32 %v1315, %v1340
      %v1355 = vadd.f32 %v1316, %v1341
      %v1356 = vadd.f32 %v1317, %v1342
      %v1357 = vadd.f32 %v1318, %v1343
      %v1358 = vadd.f32 %v1319, %v1344
      %v1359 = vadd.f32 %v1320, %v1345
      %v1360 = vadd.f32 %v1321, %v1346
      %v1361 = vlaneseq
      %v1362 = vshrl.u32 %v1361, 7
      %v1363 = vsub.s32 0, %v1362
      %v1364 = vrot.slane %v656, %v1363
      %v1365 = vmul.f32 %v622, %v1364
      %v1366 = vmul.f32 %v623, %v1364
      %v1367 = vmul.f32 %v624, %v1364
      %v1368 = vmul.f32 %v625, %v1364
      %v1369 = vmul.f32 %v626, %v1364
      %v1370 = vmul.f32 %v627, %v1364
      %v1371 = vmul.f32 %v628, %v1364
      %v1372 = vadd.f32 %v1354, %v1365
      %v1373 = vadd.f32 %v1355, %v1366
      %v1374 = vadd.f32 %v1356, %v1367
      %v1375 = vadd.f32 %v1357, %v1368
      %v1376 = vadd.f32 %v1358, %v1369
      %v1377 = vadd.f32 %v1359, %v1370
      %v1378 = vadd.f32 %v1360, %v1371
      %v1379 = vlaneseq
      %v1380 = vshrl.u32 %v1379, 7
      %v1381 = vsub.s32 1, %v1380
      %v1382 = vrot.slane %v656, %v1381
      %v1383 = vmul.f32 %v630, %v1382
      %v1384 = vmul.f32 %v631, %v1382
      %v1385 = vmul.f32 %v632, %v1382
      %v1386 = vmul.f32 %v633, %v1382
      %v1387 = vmul.f32 %v634, %v1382
      %v1388 = vmul.f32 %v635, %v1382
      %v1389 = vmul.f32 %v636, %v1382
      %v1390 = vadd.f32 %v1372, %v1383
      %v1391 = vadd.f32 %v1373, %v1384
      %v1392 = vadd.f32 %v1374, %v1385
      %v1393 = vadd.f32 %v1375, %v1386
      %v1394 = vadd.f32 %v1376, %v1387
      %v1395 = vadd.f32 %v1377, %v1388
      %v1396 = vadd.f32 %v1378, %v1389
      %v1397 = vlaneseq
      %v1398 = vshrl.u32 %v1397, 7
      %v1399 = vsub.s32 2, %v1398
      %v1400 = vrot.slane %v656, %v1399
      %v1401 = vmul.f32 %v622, %v1400
      %v1402 = vmul.f32 %v623, %v1400
      %v1403 = vmul.f32 %v624, %v1400
      %v1404 = vmul.f32 %v625, %v1400
      %v1405 = vmul.f32 %v626, %v1400
      %v1406 = vmul.f32 %v627, %v1400
      %v1407 = vmul.f32 %v628, %v1400
      %v1415 = vrot.slane %v1401, 1
      %v1416 = vrot.slane %v1402, 1
      %v1417 = vrot.slane %v1403, 1
      %v1418 = vrot.slane %v1404, 1
      %v1419 = vrot.slane %v1405, 1
      %v1420 = vrot.slane %v1406, 1
      %v1421 = vrot.slane %v1407, 1
      %v1429 = vadd.f32 %v1390, %v1415
      %v1430 = vadd.f32 %v1391, %v1416
      %v1431 = vadd.f32 %v1392, %v1417
      %v1432 = vadd.f32 %v1393, %v1418
      %v1433 = vadd.f32 %v1394, %v1419
      %v1434 = vadd.f32 %v1395, %v1420
      %v1435 = vadd.f32 %v1396, %v1421
      %v1443 = vcombine.high %v1429, %v1429
      %v1445 = vunpack.c.l.s4 1966171168
      %v1446 = vunpack.c.0.s8 %v1445
      %v1447 = vlaneseq
      %v1448 = vshrl.u32 %v1447, 7
      %v1449 = vsub.s32 %v1446, %v1448
      %v1450 = vrot.slane %v1429, %v1449
      %v1452 = vunpack.c.l.s4 1966171168
      %v1453 = vunpack.c.0.s8 %v1452
      %v1454 = vlaneseq
      %v1455 = vshrl.u32 %v1454, 7
      %v1456 = vsub.s32 %v1453, %v1455
      %v1457 = vrot.slane %v1443, %v1456
      %v1458 = vcombine.high %v1450, %v1450
      %v1459 = vcombine.high %v1457, %v1457
      %v1461 = vunpack.c.l.s4 1966171168
      %v1462 = vunpack.c.0.s8 %v1461
      %v1463 = vlaneseq
      %v1464 = vshrl.u32 %v1463, 7
      %v1465 = vsub.s32 %v1462, %v1464
      %v1466 = vrot.slane %v1450, %v1465
      %v1468 = vunpack.c.l.s4 1966171168
      %v1469 = vunpack.c.0.s8 %v1468
      %v1470 = vlaneseq
      %v1471 = vshrl.u32 %v1470, 7
      %v1472 = vsub.s32 %v1469, %v1471
      %v1473 = vrot.slane %v1457, %v1472
      %v1475 = vunpack.c.l.s4 1966171168
      %v1476 = vunpack.c.0.s8 %v1475
      %v1477 = vlaneseq
      %v1478 = vshrl.u32 %v1477, 7
      %v1479 = vsub.s32 %v1476, %v1478
      %v1480 = vrot.slane %v1458, %v1479
      %v1482 = vunpack.c.l.s4 1966171168
      %v1483 = vunpack.c.0.s8 %v1482
      %v1484 = vlaneseq
      %v1485 = vshrl.u32 %v1484, 7
      %v1486 = vsub.s32 %v1483, %v1485
      %v1487 = vrot.slane %v1459, %v1486
      %v1488 = vcombine.high %v1466, %v1466
      %v1489 = vcombine.high %v1473, %v1473
      %v1490 = vcombine.high %v1480, %v1480
      %v1491 = vcombine.high %v1430, %v1430
      %v1493 = vunpack.c.l.s4 1966171168
      %v1494 = vunpack.c.0.s8 %v1493
      %v1495 = vlaneseq
      %v1496 = vshrl.u32 %v1495, 7
      %v1497 = vsub.s32 %v1494, %v1496
      %v1498 = vrot.slane %v1430, %v1497
      %v1500 = vunpack.c.l.s4 1966171168
      %v1501 = vunpack.c.0.s8 %v1500
      %v1502 = vlaneseq
      %v1503 = vshrl.u32 %v1502, 7
      %v1504 = vsub.s32 %v1501, %v1503
      %v1505 = vrot.slane %v1491, %v1504
      %v1506 = vcombine.high %v1498, %v1498
      %v1507 = vcombine.high %v1505, %v1505
      %v1509 = vunpack.c.l.s4 1966171168
      %v1510 = vunpack.c.0.s8 %v1509
      %v1511 = vlaneseq
      %v1512 = vshrl.u32 %v1511, 7
      %v1513 = vsub.s32 %v1510, %v1512
      %v1514 = vrot.slane %v1498, %v1513
      %v1516 = vunpack.c.l.s4 1966171168
      %v1517 = vunpack.c.0.s8 %v1516
      %v1518 = vlaneseq
      %v1519 = vshrl.u32 %v1518, 7
      %v1520 = vsub.s32 %v1517, %v1519
      %v1521 = vrot.slane %v1505, %v1520
      %v1523 = vunpack.c.l.s4 1966171168
      %v1524 = vunpack.c.0.s8 %v1523
      %v1525 = vlaneseq
      %v1526 = vshrl.u32 %v1525, 7
      %v1527 = vsub.s32 %v1524, %v1526
      %v1528 = vrot.slane %v1506, %v1527
      %v1530 = vunpack.c.l.s4 1966171168
      %v1531 = vunpack.c.0.s8 %v1530
      %v1532 = vlaneseq
      %v1533 = vshrl.u32 %v1532, 7
      %v1534 = vsub.s32 %v1531, %v1533
      %v1535 = vrot.slane %v1507, %v1534
      %v1536 = vcombine.high %v1514, %v1514
      %v1537 = vcombine.high %v1521, %v1521
      %v1538 = vcombine.high %v1528, %v1528
      %v1539 = vcombine.high %v1431, %v1431
      %v1541 = vunpack.c.l.s4 1966171168
      %v1542 = vunpack.c.0.s8 %v1541
      %v1543 = vlaneseq
      %v1544 = vshrl.u32 %v1543, 7
      %v1545 = vsub.s32 %v1542, %v1544
      %v1546 = vrot.slane %v1431, %v1545
      %v1548 = vunpack.c.l.s4 1966171168
      %v1549 = vunpack.c.0.s8 %v1548
      %v1550 = vlaneseq
      %v1551 = vshrl.u32 %v1550, 7
      %v1552 = vsub.s32 %v1549, %v1551
      %v1553 = vrot.slane %v1539, %v1552
      %v1554 = vcombine.high %v1546, %v1546
      %v1555 = vcombine.high %v1553, %v1553
      %v1557 = vunpack.c.l.s4 1966171168
      %v1558 = vunpack.c.0.s8 %v1557
      %v1559 = vlaneseq
      %v1560 = vshrl.u32 %v1559, 7
      %v1561 = vsub.s32 %v1558, %v1560
      %v1562 = vrot.slane %v1546, %v1561
      %v1564 = vunpack.c.l.s4 1966171168
      %v1565 = vunpack.c.0.s8 %v1564
      %v1566 = vlaneseq
      %v1567 = vshrl.u32 %v1566, 7
      %v1568 = vsub.s32 %v1565, %v1567
      %v1569 = vrot.slane %v1553, %v1568
      %v1571 = vunpack.c.l.s4 1966171168
      %v1572 = vunpack.c.0.s8 %v1571
      %v1573 = vlaneseq
      %v1574 = vshrl.u32 %v1573, 7
      %v1575 = vsub.s32 %v1572, %v1574
      %v1576 = vrot.slane %v1554, %v1575
      %v1578 = vunpack.c.l.s4 1966171168
      %v1579 = vunpack.c.0.s8 %v1578
      %v1580 = vlaneseq
      %v1581 = vshrl.u32 %v1580, 7
      %v1582 = vsub.s32 %v1579, %v1581
      %v1583 = vrot.slane %v1555, %v1582
      %v1584 = vcombine.high %v1562, %v1562
      %v1585 = vcombine.high %v1569, %v1569
      %v1586 = vcombine.high %v1576, %v1576
      %v1587 = vcombine.high %v1432, %v1432
      %v1589 = vunpack.c.l.s4 1966171168
      %v1590 = vunpack.c.0.s8 %v1589
      %v1591 = vlaneseq
      %v1592 = vshrl.u32 %v1591, 7
      %v1593 = vsub.s32 %v1590, %v1592
      %v1594 = vrot.slane %v1432, %v1593
      %v1596 = vunpack.c.l.s4 1966171168
      %v1597 = vunpack.c.0.s8 %v1596
      %v1598 = vlaneseq
      %v1599 = vshrl.u32 %v1598, 7
      %v1600 = vsub.s32 %v1597, %v1599
      %v1601 = vrot.slane %v1587, %v1600
      %v1602 = vcombine.high %v1594, %v1594
      %v1603 = vcombine.high %v1601, %v1601
      %v1605 = vunpack.c.l.s4 1966171168
      %v1606 = vunpack.c.0.s8 %v1605
      %v1607 = vlaneseq
      %v1608 = vshrl.u32 %v1607, 7
      %v1609 = vsub.s32 %v1606, %v1608
      %v1610 = vrot.slane %v1594, %v1609
      %v1612 = vunpack.c.l.s4 1966171168
      %v1613 = vunpack.c.0.s8 %v1612
      %v1614 = vlaneseq
      %v1615 = vshrl.u32 %v1614, 7
      %v1616 = vsub.s32 %v1613, %v1615
      %v1617 = vrot.slane %v1601, %v1616
      %v1619 = vunpack.c.l.s4 1966171168
      %v1620 = vunpack.c.0.s8 %v1619
      %v1621 = vlaneseq
      %v1622 = vshrl.u32 %v1621, 7
      %v1623 = vsub.s32 %v1620, %v1622
      %v1624 = vrot.slane %v1602, %v1623
      %v1626 = vunpack.c.l.s4 1966171168
      %v1627 = vunpack.c.0.s8 %v1626
      %v1628 = vlaneseq
      %v1629 = vshrl.u32 %v1628, 7
      %v1630 = vsub.s32 %v1627, %v1629
      %v1631 = vrot.slane %v1603, %v1630
      %v1632 = vcombine.high %v1610, %v1610
      %v1633 = vcombine.high %v1617, %v1617
      %v1634 = vcombine.high %v1624, %v1624
      %v1635 = vcombine.high %v1433, %v1433
      %v1637 = vunpack.c.l.s4 1966171168
      %v1638 = vunpack.c.0.s8 %v1637
      %v1639 = vlaneseq
      %v1640 = vshrl.u32 %v1639, 7
      %v1641 = vsub.s32 %v1638, %v1640
      %v1642 = vrot.slane %v1433, %v1641
      %v1644 = vunpack.c.l.s4 1966171168
      %v1645 = vunpack.c.0.s8 %v1644
      %v1646 = vlaneseq
      %v1647 = vshrl.u32 %v1646, 7
      %v1648 = vsub.s32 %v1645, %v1647
      %v1649 = vrot.slane %v1635, %v1648
      %v1650 = vcombine.high %v1642, %v1642
      %v1651 = vcombine.high %v1649, %v1649
      %v1653 = vunpack.c.l.s4 1966171168
      %v1654 = vunpack.c.0.s8 %v1653
      %v1655 = vlaneseq
      %v1656 = vshrl.u32 %v1655, 7
      %v1657 = vsub.s32 %v1654, %v1656
      %v1658 = vrot.slane %v1642, %v1657
      %v1660 = vunpack.c.l.s4 1966171168
      %v1661 = vunpack.c.0.s8 %v1660
      %v1662 = vlaneseq
      %v1663 = vshrl.u32 %v1662, 7
      %v1664 = vsub.s32 %v1661, %v1663
      %v1665 = vrot.slane %v1649, %v1664
      %v1667 = vunpack.c.l.s4 1966171168
      %v1668 = vunpack.c.0.s8 %v1667
      %v1669 = vlaneseq
      %v1670 = vshrl.u32 %v1669, 7
      %v1671 = vsub.s32 %v1668, %v1670
      %v1672 = vrot.slane %v1650, %v1671
      %v1674 = vunpack.c.l.s4 1966171168
      %v1675 = vunpack.c.0.s8 %v1674
      %v1676 = vlaneseq
      %v1677 = vshrl.u32 %v1676, 7
      %v1678 = vsub.s32 %v1675, %v1677
      %v1679 = vrot.slane %v1651, %v1678
      %v1680 = vcombine.high %v1658, %v1658
      %v1681 = vcombine.high %v1665, %v1665
      %v1682 = vcombine.high %v1672, %v1672
      %v1683 = vcombine.high %v1434, %v1434
      %v1685 = vunpack.c.l.s4 1966171168
      %v1686 = vunpack.c.0.s8 %v1685
      %v1687 = vlaneseq
      %v1688 = vshrl.u32 %v1687, 7
      %v1689 = vsub.s32 %v1686, %v1688
      %v1690 = vrot.slane %v1434, %v1689
      %v1692 = vunpack.c.l.s4 1966171168
      %v1693 = vunpack.c.0.s8 %v1692
      %v1694 = vlaneseq
      %v1695 = vshrl.u32 %v1694, 7
      %v1696 = vsub.s32 %v1693, %v1695
      %v1697 = vrot.slane %v1683, %v1696
      %v1698 = vcombine.high %v1690, %v1690
      %v1699 = vcombine.high %v1697, %v1697
      %v1701 = vunpack.c.l.s4 1966171168
      %v1702 = vunpack.c.0.s8 %v1701
      %v1703 = vlaneseq
      %v1704 = vshrl.u32 %v1703, 7
      %v1705 = vsub.s32 %v1702, %v1704
      %v1706 = vrot.slane %v1690, %v1705
      %v1708 = vunpack.c.l.s4 1966171168
      %v1709 = vunpack.c.0.s8 %v1708
      %v1710 = vlaneseq
      %v1711 = vshrl.u32 %v1710, 7
      %v1712 = vsub.s32 %v1709, %v1711
      %v1713 = vrot.slane %v1697, %v1712
      %v1715 = vunpack.c.l.s4 1966171168
      %v1716 = vunpack.c.0.s8 %v1715
      %v1717 = vlaneseq
      %v1718 = vshrl.u32 %v1717, 7
      %v1719 = vsub.s32 %v1716, %v1718
      %v1720 = vrot.slane %v1698, %v1719
      %v1722 = vunpack.c.l.s4 1966171168
      %v1723 = vunpack.c.0.s8 %v1722
      %v1724 = vlaneseq
      %v1725 = vshrl.u32 %v1724, 7
      %v1726 = vsub.s32 %v1723, %v1725
      %v1727 = vrot.slane %v1699, %v1726
      %v1728 = vcombine.high %v1706, %v1706
      %v1729 = vcombine.high %v1713, %v1713
      %v1730 = vcombine.high %v1720, %v1720
      %v1731 = vcombine.high %v1435, %v1435
      %v1733 = vunpack.c.l.s4 1966171168
      %v1734 = vunpack.c.0.s8 %v1733
      %v1735 = vlaneseq
      %v1736 = vshrl.u32 %v1735, 7
      %v1737 = vsub.s32 %v1734, %v1736
      %v1738 = vrot.slane %v1435, %v1737
      %v1740 = vunpack.c.l.s4 1966171168
      %v1741 = vunpack.c.0.s8 %v1740
      %v1742 = vlaneseq
      %v1743 = vshrl.u32 %v1742, 7
      %v1744 = vsub.s32 %v1741, %v1743
      %v1745 = vrot.slane %v1731, %v1744
      %v1746 = vcombine.high %v1738, %v1738
      %v1747 = vcombine.high %v1745, %v1745
      %v1749 = vunpack.c.l.s4 1966171168
      %v1750 = vunpack.c.0.s8 %v1749
      %v1751 = vlaneseq
      %v1752 = vshrl.u32 %v1751, 7
      %v1753 = vsub.s32 %v1750, %v1752
      %v1754 = vrot.slane %v1738, %v1753
      %v1756 = vunpack.c.l.s4 1966171168
      %v1757 = vunpack.c.0.s8 %v1756
      %v1758 = vlaneseq
      %v1759 = vshrl.u32 %v1758, 7
      %v1760 = vsub.s32 %v1757, %v1759
      %v1761 = vrot.slane %v1745, %v1760
      %v1763 = vunpack.c.l.s4 1966171168
      %v1764 = vunpack.c.0.s8 %v1763
      %v1765 = vlaneseq
      %v1766 = vshrl.u32 %v1765, 7
      %v1767 = vsub.s32 %v1764, %v1766
      %v1768 = vrot.slane %v1746, %v1767
      %v1770 = vunpack.c.l.s4 1966171168
      %v1771 = vunpack.c.0.s8 %v1770
      %v1772 = vlaneseq
      %v1773 = vshrl.u32 %v1772, 7
      %v1774 = vsub.s32 %v1771, %v1773
      %v1775 = vrot.slane %v1747, %v1774
      %v1776 = vcombine.high %v1754, %v1754
      %v1777 = vcombine.high %v1761, %v1761
      %v1778 = vcombine.high %v1768, %v1768
      %v1779 = vld [vmem:[%s4] sm:$0xff]
      %v1780 = vld [vmem:[%s5] sm:$0x1]
      %v1781 = vcombine.low %v1466, %v1480
      %v1782 = vcombine.low %v1488, %v1490
      %v1783 = vcombine.low %v1473, %v1487
      %v1784 = vcombine.low %v1489, %v1514
      %v1786 = vunpack.c.l.s4 1966171168
      %v1787 = vunpack.c.0.s8 %v1786
      %v1788 = vlaneseq
      %v1789 = vshrl.u32 %v1788, 7
      %v1790 = vsub.s32 %v1787, %v1789
      %v1791 = vrot.slane %v1781, %v1790
      %v1793 = vunpack.c.l.s4 1966171168
      %v1794 = vunpack.c.0.s8 %v1793
      %v1795 = vlaneseq
      %v1796 = vshrl.u32 %v1795, 7
      %v1797 = vsub.s32 %v1794, %v1796
      %v1798 = vrot.slane %v1782, %v1797
      %v1800 = vunpack.c.l.s4 1966171168
      %v1801 = vunpack.c.0.s8 %v1800
      %v1802 = vlaneseq
      %v1803 = vshrl.u32 %v1802, 7
      %v1804 = vsub.s32 %v1801, %v1803
      %v1805 = vrot.slane %v1783, %v1804
      %v1807 = vunpack.c.l.s4 1966171168
      %v1808 = vunpack.c.0.s8 %v1807
      %v1809 = vlaneseq
      %v1810 = vshrl.u32 %v1809, 7
      %v1811 = vsub.s32 %v1808, %v1810
      %v1812 = vrot.slane %v1784, %v1811
      %v1813 = vcombine.low %v1791, %v1798
      %v1814 = vcombine.low %v1805, %v1812
      %v1816 = vunpack.c.l.s4 1966171168
      %v1817 = vunpack.c.0.s8 %v1816
      %v1818 = vlaneseq
      %v1819 = vshrl.u32 %v1818, 7
      %v1820 = vsub.s32 %v1817, %v1819
      %v1821 = vrot.slane %v1813, %v1820
      %v1823 = vunpack.c.l.s4 1966171168
      %v1824 = vunpack.c.0.s8 %v1823
      %v1825 = vlaneseq
      %v1826 = vshrl.u32 %v1825, 7
      %v1827 = vsub.s32 %v1824, %v1826
      %v1828 = vrot.slane %v1814, %v1827
      %v1829 = vcombine.low %v1821, %v1828
      %v1830 = vcombine.low %v1528, %v1536
      %v1831 = vcombine.low %v1538, %v1521
      %v1832 = vcombine.low %v1535, %v1537
      %v1833 = vcombine.low %v1562, %v1576
      %v1835 = vunpack.c.l.s4 1966171168
      %v1836 = vunpack.c.0.s8 %v1835
      %v1837 = vlaneseq
      %v1838 = vshrl.u32 %v1837, 7
      %v1839 = vsub.s32 %v1836, %v1838
      %v1840 = vrot.slane %v1830, %v1839
      %v1842 = vunpack.c.l.s4 1966171168
      %v1843 = vunpack.c.0.s8 %v1842
      %v1844 = vlaneseq
      %v1845 = vshrl.u32 %v1844, 7
      %v1846 = vsub.s32 %v1843, %v1845
      %v1847 = vrot.slane %v1831, %v1846
      %v1849 = vunpack.c.l.s4 1966171168
      %v1850 = vunpack.c.0.s8 %v1849
      %v1851 = vlaneseq
      %v1852 = vshrl.u32 %v1851, 7
      %v1853 = vsub.s32 %v1850, %v1852
      %v1854 = vrot.slane %v1832, %v1853
      %v1856 = vunpack.c.l.s4 1966171168
      %v1857 = vunpack.c.0.s8 %v1856
      %v1858 = vlaneseq
      %v1859 = vshrl.u32 %v1858, 7
      %v1860 = vsub.s32 %v1857, %v1859
      %v1861 = vrot.slane %v1833, %v1860
      %v1862 = vcombine.low %v1840, %v1847
      %v1863 = vcombine.low %v1854, %v1861
      %v1865 = vunpack.c.l.s4 1966171168
      %v1866 = vunpack.c.0.s8 %v1865
      %v1867 = vlaneseq
      %v1868 = vshrl.u32 %v1867, 7
      %v1869 = vsub.s32 %v1866, %v1868
      %v1870 = vrot.slane %v1862, %v1869
      %v1872 = vunpack.c.l.s4 1966171168
      %v1873 = vunpack.c.0.s8 %v1872
      %v1874 = vlaneseq
      %v1875 = vshrl.u32 %v1874, 7
      %v1876 = vsub.s32 %v1873, %v1875
      %v1877 = vrot.slane %v1863, %v1876
      %v1878 = vcombine.low %v1870, %v1877
      %v1879 = vcombine.low %v1584, %v1586
      %v1880 = vcombine.low %v1569, %v1583
      %v1881 = vcombine.low %v1585, %v1610
      %v1882 = vcombine.low %v1624, %v1632
      %v1884 = vunpack.c.l.s4 1966171168
      %v1885 = vunpack.c.0.s8 %v1884
      %v1886 = vlaneseq
      %v1887 = vshrl.u32 %v1886, 7
      %v1888 = vsub.s32 %v1885, %v1887
      %v1889 = vrot.slane %v1879, %v1888
      %v1891 = vunpack.c.l.s4 1966171168
      %v1892 = vunpack.c.0.s8 %v1891
      %v1893 = vlaneseq
      %v1894 = vshrl.u32 %v1893, 7
      %v1895 = vsub.s32 %v1892, %v1894
      %v1896 = vrot.slane %v1880, %v1895
      %v1898 = vunpack.c.l.s4 1966171168
      %v1899 = vunpack.c.0.s8 %v1898
      %v1900 = vlaneseq
      %v1901 = vshrl.u32 %v1900, 7
      %v1902 = vsub.s32 %v1899, %v1901
      %v1903 = vrot.slane %v1881, %v1902
      %v1905 = vunpack.c.l.s4 1966171168
      %v1906 = vunpack.c.0.s8 %v1905
      %v1907 = vlaneseq
      %v1908 = vshrl.u32 %v1907, 7
      %v1909 = vsub.s32 %v1906, %v1908
      %v1910 = vrot.slane %v1882, %v1909
      %v1911 = vcombine.low %v1889, %v1896
      %v1912 = vcombine.low %v1903, %v1910
      %v1914 = vunpack.c.l.s4 1966171168
      %v1915 = vunpack.c.0.s8 %v1914
      %v1916 = vlaneseq
      %v1917 = vshrl.u32 %v1916, 7
      %v1918 = vsub.s32 %v1915, %v1917
      %v1919 = vrot.slane %v1911, %v1918
      %v1921 = vunpack.c.l.s4 1966171168
      %v1922 = vunpack.c.0.s8 %v1921
      %v1923 = vlaneseq
      %v1924 = vshrl.u32 %v1923, 7
      %v1925 = vsub.s32 %v1922, %v1924
      %v1926 = vrot.slane %v1912, %v1925
      %v1927 = vcombine.low %v1919, %v1926
      %v1928 = vcombine.low %v1634, %v1617
      %v1929 = vcombine.low %v1631, %v1633
      %v1930 = vcombine.low %v1658, %v1672
      %v1931 = vcombine.low %v1680, %v1682
      %v1933 = vunpack.c.l.s4 1966171168
      %v1934 = vunpack.c.0.s8 %v1933
      %v1935 = vlaneseq
      %v1936 = vshrl.u32 %v1935, 7
      %v1937 = vsub.s32 %v1934, %v1936
      %v1938 = vrot.slane %v1928, %v1937
      %v1940 = vunpack.c.l.s4 1966171168
      %v1941 = vunpack.c.0.s8 %v1940
      %v1942 = vlaneseq
      %v1943 = vshrl.u32 %v1942, 7
      %v1944 = vsub.s32 %v1941, %v1943
      %v1945 = vrot.slane %v1929, %v1944
      %v1947 = vunpack.c.l.s4 1966171168
      %v1948 = vunpack.c.0.s8 %v1947
      %v1949 = vlaneseq
      %v1950 = vshrl.u32 %v1949, 7
      %v1951 = vsub.s32 %v1948, %v1950
      %v1952 = vrot.slane %v1930, %v1951
      %v1954 = vunpack.c.l.s4 1966171168
      %v1955 = vunpack.c.0.s8 %v1954
      %v1956 = vlaneseq
      %v1957 = vshrl.u32 %v1956, 7
      %v1958 = vsub.s32 %v1955, %v1957
      %v1959 = vrot.slane %v1931, %v1958
      %v1960 = vcombine.low %v1938, %v1945
      %v1961 = vcombine.low %v1952, %v1959
      %v1963 = vunpack.c.l.s4 1966171168
      %v1964 = vunpack.c.0.s8 %v1963
      %v1965 = vlaneseq
      %v1966 = vshrl.u32 %v1965, 7
      %v1967 = vsub.s32 %v1964, %v1966
      %v1968 = vrot.slane %v1960, %v1967
      %v1970 = vunpack.c.l.s4 1966171168
      %v1971 = vunpack.c.0.s8 %v1970
      %v1972 = vlaneseq
      %v1973 = vshrl.u32 %v1972, 7
      %v1974 = vsub.s32 %v1971, %v1973
      %v1975 = vrot.slane %v1961, %v1974
      %v1976 = vcombine.low %v1968, %v1975
      %v1977 = vcombine.low %v1665, %v1679
      %v1978 = vcombine.low %v1681, %v1706
      %v1979 = vcombine.low %v1720, %v1728
      %v1980 = vcombine.low %v1730, %v1713
      %v1982 = vunpack.c.l.s4 1966171168
      %v1983 = vunpack.c.0.s8 %v1982
      %v1984 = vlaneseq
      %v1985 = vshrl.u32 %v1984, 7
      %v1986 = vsub.s32 %v1983, %v1985
      %v1987 = vrot.slane %v1977, %v1986
      %v1989 = vunpack.c.l.s4 1966171168
      %v1990 = vunpack.c.0.s8 %v1989
      %v1991 = vlaneseq
      %v1992 = vshrl.u32 %v1991, 7
      %v1993 = vsub.s32 %v1990, %v1992
      %v1994 = vrot.slane %v1978, %v1993
      %v1996 = vunpack.c.l.s4 1966171168
      %v1997 = vunpack.c.0.s8 %v1996
      %v1998 = vlaneseq
      %v1999 = vshrl.u32 %v1998, 7
      %v2000 = vsub.s32 %v1997, %v1999
      %v2001 = vrot.slane %v1979, %v2000
      %v2003 = vunpack.c.l.s4 1966171168
      %v2004 = vunpack.c.0.s8 %v2003
      %v2005 = vlaneseq
      %v2006 = vshrl.u32 %v2005, 7
      %v2007 = vsub.s32 %v2004, %v2006
      %v2008 = vrot.slane %v1980, %v2007
      %v2009 = vcombine.low %v1987, %v1994
      %v2010 = vcombine.low %v2001, %v2008
      %v2012 = vunpack.c.l.s4 1966171168
      %v2013 = vunpack.c.0.s8 %v2012
      %v2014 = vlaneseq
      %v2015 = vshrl.u32 %v2014, 7
      %v2016 = vsub.s32 %v2013, %v2015
      %v2017 = vrot.slane %v2009, %v2016
      %v2019 = vunpack.c.l.s4 1966171168
      %v2020 = vunpack.c.0.s8 %v2019
      %v2021 = vlaneseq
      %v2022 = vshrl.u32 %v2021, 7
      %v2023 = vsub.s32 %v2020, %v2022
      %v2024 = vrot.slane %v2010, %v2023
      %v2025 = vcombine.low %v2017, %v2024
      %v2026 = vcombine.low %v1727, %v1729
      %v2027 = vcombine.low %v1754, %v1768
      %v2028 = vcombine.low %v1776, %v1778
      %v2029 = vcombine.low %v1761, %v1775
      %v2031 = vunpack.c.l.s4 1966171168
      %v2032 = vunpack.c.0.s8 %v2031
      %v2033 = vlaneseq
      %v2034 = vshrl.u32 %v2033, 7
      %v2035 = vsub.s32 %v2032, %v2034
      %v2036 = vrot.slane %v2026, %v2035
      %v2038 = vunpack.c.l.s4 1966171168
      %v2039 = vunpack.c.0.s8 %v2038
      %v2040 = vlaneseq
      %v2041 = vshrl.u32 %v2040, 7
      %v2042 = vsub.s32 %v2039, %v2041
      %v2043 = vrot.slane %v2027, %v2042
      %v2045 = vunpack.c.l.s4 1966171168
      %v2046 = vunpack.c.0.s8 %v2045
      %v2047 = vlaneseq
      %v2048 = vshrl.u32 %v2047, 7
      %v2049 = vsub.s32 %v2046, %v2048
      %v2050 = vrot.slane %v2028, %v2049
      %v2052 = vunpack.c.l.s4 1966171168
      %v2053 = vunpack.c.0.s8 %v2052
      %v2054 = vlaneseq
      %v2055 = vshrl.u32 %v2054, 7
      %v2056 = vsub.s32 %v2053, %v2055
      %v2057 = vrot.slane %v2029, %v2056
      %v2058 = vcombine.low %v2036, %v2043
      %v2059 = vcombine.low %v2050, %v2057
      %v2061 = vunpack.c.l.s4 1966171168
      %v2062 = vunpack.c.0.s8 %v2061
      %v2063 = vlaneseq
      %v2064 = vshrl.u32 %v2063, 7
      %v2065 = vsub.s32 %v2062, %v2064
      %v2066 = vrot.slane %v2058, %v2065
      %v2068 = vunpack.c.l.s4 1966171168
      %v2069 = vunpack.c.0.s8 %v2068
      %v2070 = vlaneseq
      %v2071 = vshrl.u32 %v2070, 7
      %v2072 = vsub.s32 %v2069, %v2071
      %v2073 = vrot.slane %v2059, %v2072
      %v2074 = vcombine.low %v2066, %v2073
      %v2076 = vunpack.c.l.s4 1966171168
      %v2077 = vunpack.c.0.s8 %v2076
      %v2078 = vlaneseq
      %v2079 = vshrl.u32 %v2078, 7
      %v2080 = vsub.s32 %v2077, %v2079
      %v2081 = vrot.slane %v1777, %v2080
      %v2083 = vunpack.c.l.s4 1966171168
      %v2084 = vunpack.c.0.s8 %v2083
      %v2085 = vlaneseq
      %v2086 = vshrl.u32 %v2085, 7
      %v2087 = vsub.s32 %v2084, %v2086
      %v2088 = vrot.slane %v2081, %v2087
      %v2090 = vrot.slane %v1779, 4
      %v2091 = vsel %vm297, %v1829, 0
      %v2093 = vsel %vm297, %v1878, 0
      %v2095 = vsel %vm297, %v1927, 0
      %v2097 = vsel %vm297, %v1976, 0
      %v2099 = vsel %vm297, %v2025, 0
      %v2101 = vsel %vm297, %v2074, 0
      %v2103 = vsel %vm297, %v2088, 0
      %v2105 = vsel %vm394, %v2090, 0
      %2107 = vmatprep.subr.mxu0 0.0
      %2108 = vmatpush1.msra.mxu0 0.0
      %2109 = vmatprep.subr.mxu0 0.0
      %2110 = vmatpush1.msra.mxu0 0.0
      %2111 = vmatprep.subr.mxu0 0.0
      %2112 = vmatpush1.msra.mxu0 0.0
      %2113 = vmatprep.subr.mxu0 0.0
      %2114 = vmatpush1.msra.mxu0 0.0
      %2115 = vmatprep.subr.mxu0 0.0
      %2116 = vmatpush1.msra.mxu0 0.0
      %2117 = vmatprep.subr.mxu0 0.0
      %2118 = vmatpush1.msra.mxu0 0.0
      %2119 = vmatprep.subr.mxu0 0.0
      %2120 = vmatpush1.msra.mxu0 0.0
      %2121 = vmatprep.subr.mxu0 0.0
      %2122 = vmatpush1.msra.mxu0 0.0
      %2123 = vmatprep.subr.mxu0 0.0
      %2124 = vmatpush1.msra.mxu0 0.0
      %2125 = vmatprep.subr.mxu0 0.0
      %2126 = vmatpush1.msra.mxu0 0.0
      %2127 = vmatprep.subr.mxu0 0.0
      %2128 = vmatpush1.msra.mxu0 0.0
      %2129 = vmatprep.subr.mxu0 0.0
      %2130 = vmatpush1.msra.mxu0 0.0
      %2131 = vmatprep.subr.mxu0 0.0
      %2132 = vmatpush1.msra.mxu0 0.0
      %2133 = vmatprep.subr.mxu0 0.0
      %2134 = vmatpush1.msra.mxu0 0.0
      %2135 = vmatprep.subr.mxu0 0.0
      %2136 = vmatpush1.msra.mxu0 0.0
      %2137 = vmatprep.subr.mxu0 0.0
      %2138 = vmatpush1.msra.mxu0 %v2105
      %2139 = vmatprep.subr.mxu0 0.0
      %2140 = vmatpush2.msra.mxu0 0.0
      %2141 = vmatprep.subr.mxu0 0.0
      %2142 = vmatpush2.msra.mxu0 0.0
      %2143 = vmatprep.subr.mxu0 0.0
      %2144 = vmatpush2.msra.mxu0 0.0
      %2145 = vmatprep.subr.mxu0 0.0
      %2146 = vmatpush2.msra.mxu0 0.0
      %2147 = vmatprep.subr.mxu0 0.0
      %2148 = vmatpush2.msra.mxu0 0.0
      %2149 = vmatprep.subr.mxu0 0.0
      %2150 = vmatpush2.msra.mxu0 0.0
      %2151 = vmatprep.subr.mxu0 0.0
      %2152 = vmatpush2.msra.mxu0 0.0
      %2153 = vmatprep.subr.mxu0 0.0
      %2154 = vmatpush2.msra.mxu0 0.0
      %2155 = vmatprep.subr.mxu0 0.0
      %2156 = vmatpush2.msra.mxu0 0.0
      %2157 = vmatprep.subr.mxu0 0.0
      %2158 = vmatpush2.msra.mxu0 0.0
      %2159 = vmatprep.subr.mxu0 0.0
      %2160 = vmatpush2.msra.mxu0 0.0
      %2161 = vmatprep.subr.mxu0 0.0
      %2162 = vmatpush2.msra.mxu0 0.0
      %2163 = vmatprep.subr.mxu0 0.0
      %2164 = vmatpush2.msra.mxu0 0.0
      %2165 = vmatprep.subr.mxu0 0.0
      %2166 = vmatpush2.msra.mxu0 0.0
      %2167 = vmatprep.subr.mxu0 0.0
      %2168 = vmatpush2.msra.mxu0 0.0
      %2169 = vmatprep.subr.mxu0 0.0
      %2170 = vmatpush2.msra.mxu0 0.0
      %2171 = vmatprep.mubr.f32.mxu0 0.0
      %2172 = vmatmul.mubr.f32.gmra.mxu0 %v2091
      %v2173 = vpop.f32.mrf.mxu0
      %v2174 = vadd.f32 0.0, %v2173
      %v2175 = vpop.f32.mrf.mxu0
      %2176 = vmatprep.mubr.f32.mxu0 0.0
      %2177 = vmatmul.mubr.f32.gmra.mxu0 %v2093
      %v2178 = vpop.f32.mrf.mxu0
      %v2179 = vadd.f32 0.0, %v2178
      %v2180 = vpop.f32.mrf.mxu0
      %2181 = vmatprep.mubr.f32.mxu0 0.0
      %2182 = vmatmul.mubr.f32.gmra.mxu0 %v2095
      %v2183 = vpop.f32.mrf.mxu0
      %v2184 = vadd.f32 0.0, %v2183
      %v2185 = vpop.f32.mrf.mxu0
      %2186 = vmatprep.mubr.f32.mxu0 0.0
      %2187 = vmatmul.mubr.f32.gmra.mxu0 %v2097
      %v2188 = vpop.f32.mrf.mxu0
      %v2189 = vadd.f32 0.0, %v2188
      %v2190 = vpop.f32.mrf.mxu0
      %2191 = vmatprep.mubr.f32.mxu0 0.0
      %2192 = vmatmul.mubr.f32.gmra.mxu0 %v2099
      %v2193 = vpop.f32.mrf.mxu0
      %v2194 = vadd.f32 0.0, %v2193
      %v2195 = vpop.f32.mrf.mxu0
      %2196 = vmatprep.mubr.f32.mxu0 0.0
      %2197 = vmatmul.mubr.f32.gmra.mxu0 %v2101
      %v2198 = vpop.f32.mrf.mxu0
      %v2199 = vadd.f32 0.0, %v2198
      %v2200 = vpop.f32.mrf.mxu0
      %2201 = vmatprep.mubr.f32.mxu0 0.0
      %2202 = vmatmul.mubr.f32.gmra.mxu0 %v2103
      %v2203 = vpop.f32.mrf.mxu0
      %v2204 = vadd.f32 0.0, %v2203
      %v2205 = vpop.f32.mrf.mxu0
      %2206 = vdwg.mxu0
      %v2207 = vcombine.low %v905, %v919
      %v2208 = vcombine.low %v927, %v929
      %v2209 = vcombine.low %v912, %v926
      %v2210 = vcombine.low %v928, %v953
      %v2212 = vunpack.c.l.s4 1966171168
      %v2213 = vunpack.c.0.s8 %v2212
      %v2214 = vlaneseq
      %v2215 = vshrl.u32 %v2214, 7
      %v2216 = vsub.s32 %v2213, %v2215
      %v2217 = vrot.slane %v2207, %v2216
      %v2219 = vunpack.c.l.s4 1966171168
      %v2220 = vunpack.c.0.s8 %v2219
      %v2221 = vlaneseq
      %v2222 = vshrl.u32 %v2221, 7
      %v2223 = vsub.s32 %v2220, %v2222
      %v2224 = vrot.slane %v2208, %v2223
      %v2226 = vunpack.c.l.s4 1966171168
      %v2227 = vunpack.c.0.s8 %v2226
      %v2228 = vlaneseq
      %v2229 = vshrl.u32 %v2228, 7
      %v2230 = vsub.s32 %v2227, %v2229
      %v2231 = vrot.slane %v2209, %v2230
      %v2233 = vunpack.c.l.s4 1966171168
      %v2234 = vunpack.c.0.s8 %v2233
      %v2235 = vlaneseq
      %v2236 = vshrl.u32 %v2235, 7
      %v2237 = vsub.s32 %v2234, %v2236
      %v2238 = vrot.slane %v2210, %v2237
      %v2239 = vcombine.low %v2217, %v2224
      %v2240 = vcombine.low %v2231, %v2238
      %v2242 = vunpack.c.l.s4 1966171168
      %v2243 = vunpack.c.0.s8 %v2242
      %v2244 = vlaneseq
      %v2245 = vshrl.u32 %v2244, 7
      %v2246 = vsub.s32 %v2243, %v2245
      %v2247 = vrot.slane %v2239, %v2246
      %v2249 = vunpack.c.l.s4 1966171168
      %v2250 = vunpack.c.0.s8 %v2249
      %v2251 = vlaneseq
      %v2252 = vshrl.u32 %v2251, 7
      %v2253 = vsub.s32 %v2250, %v2252
      %v2254 = vrot.slane %v2240, %v2253
      %v2255 = vcombine.low %v2247, %v2254
      %v2256 = vcombine.low %v967, %v975
      %v2257 = vcombine.low %v977, %v960
      %v2258 = vcombine.low %v974, %v976
      %v2259 = vcombine.low %v1001, %v1015
      %v2261 = vunpack.c.l.s4 1966171168
      %v2262 = vunpack.c.0.s8 %v2261
      %v2263 = vlaneseq
      %v2264 = vshrl.u32 %v2263, 7
      %v2265 = vsub.s32 %v2262, %v2264
      %v2266 = vrot.slane %v2256, %v2265
      %v2268 = vunpack.c.l.s4 1966171168
      %v2269 = vunpack.c.0.s8 %v2268
      %v2270 = vlaneseq
      %v2271 = vshrl.u32 %v2270, 7
      %v2272 = vsub.s32 %v2269, %v2271
      %v2273 = vrot.slane %v2257, %v2272
      %v2275 = vunpack.c.l.s4 1966171168
      %v2276 = vunpack.c.0.s8 %v2275
      %v2277 = vlaneseq
      %v2278 = vshrl.u32 %v2277, 7
      %v2279 = vsub.s32 %v2276, %v2278
      %v2280 = vrot.slane %v2258, %v2279
      %v2282 = vunpack.c.l.s4 1966171168
      %v2283 = vunpack.c.0.s8 %v2282
      %v2284 = vlaneseq
      %v2285 = vshrl.u32 %v2284, 7
      %v2286 = vsub.s32 %v2283, %v2285
      %v2287 = vrot.slane %v2259, %v2286
      %v2288 = vcombine.low %v2266, %v2273
      %v2289 = vcombine.low %v2280, %v2287
      %v2291 = vunpack.c.l.s4 1966171168
      %v2292 = vunpack.c.0.s8 %v2291
      %v2293 = vlaneseq
      %v2294 = vshrl.u32 %v2293, 7
      %v2295 = vsub.s32 %v2292, %v2294
      %v2296 = vrot.slane %v2288, %v2295
      %v2298 = vunpack.c.l.s4 1966171168
      %v2299 = vunpack.c.0.s8 %v2298
      %v2300 = vlaneseq
      %v2301 = vshrl.u32 %v2300, 7
      %v2302 = vsub.s32 %v2299, %v2301
      %v2303 = vrot.slane %v2289, %v2302
      %v2304 = vcombine.low %v2296, %v2303
      %v2305 = vcombine.low %v1023, %v1025
      %v2306 = vcombine.low %v1008, %v1022
      %v2307 = vcombine.low %v1024, %v1049
      %v2308 = vcombine.low %v1063, %v1071
      %v2310 = vunpack.c.l.s4 1966171168
      %v2311 = vunpack.c.0.s8 %v2310
      %v2312 = vlaneseq
      %v2313 = vshrl.u32 %v2312, 7
      %v2314 = vsub.s32 %v2311, %v2313
      %v2315 = vrot.slane %v2305, %v2314
      %v2317 = vunpack.c.l.s4 1966171168
      %v2318 = vunpack.c.0.s8 %v2317
      %v2319 = vlaneseq
      %v2320 = vshrl.u32 %v2319, 7
      %v2321 = vsub.s32 %v2318, %v2320
      %v2322 = vrot.slane %v2306, %v2321
      %v2324 = vunpack.c.l.s4 1966171168
      %v2325 = vunpack.c.0.s8 %v2324
      %v2326 = vlaneseq
      %v2327 = vshrl.u32 %v2326, 7
      %v2328 = vsub.s32 %v2325, %v2327
      %v2329 = vrot.slane %v2307, %v2328
      %v2331 = vunpack.c.l.s4 1966171168
      %v2332 = vunpack.c.0.s8 %v2331
      %v2333 = vlaneseq
      %v2334 = vshrl.u32 %v2333, 7
      %v2335 = vsub.s32 %v2332, %v2334
      %v2336 = vrot.slane %v2308, %v2335
      %v2337 = vcombine.low %v2315, %v2322
      %v2338 = vcombine.low %v2329, %v2336
      %v2340 = vunpack.c.l.s4 1966171168
      %v2341 = vunpack.c.0.s8 %v2340
      %v2342 = vlaneseq
      %v2343 = vshrl.u32 %v2342, 7
      %v2344 = vsub.s32 %v2341, %v2343
      %v2345 = vrot.slane %v2337, %v2344
      %v2347 = vunpack.c.l.s4 1966171168
      %v2348 = vunpack.c.0.s8 %v2347
      %v2349 = vlaneseq
      %v2350 = vshrl.u32 %v2349, 7
      %v2351 = vsub.s32 %v2348, %v2350
      %v2352 = vrot.slane %v2338, %v2351
      %v2353 = vcombine.low %v2345, %v2352
      %v2354 = vcombine.low %v1073, %v1056
      %v2355 = vcombine.low %v1070, %v1072
      %v2356 = vcombine.low %v1097, %v1111
      %v2357 = vcombine.low %v1119, %v1121
      %v2359 = vunpack.c.l.s4 1966171168
      %v2360 = vunpack.c.0.s8 %v2359
      %v2361 = vlaneseq
      %v2362 = vshrl.u32 %v2361, 7
      %v2363 = vsub.s32 %v2360, %v2362
      %v2364 = vrot.slane %v2354, %v2363
      %v2366 = vunpack.c.l.s4 1966171168
      %v2367 = vunpack.c.0.s8 %v2366
      %v2368 = vlaneseq
      %v2369 = vshrl.u32 %v2368, 7
      %v2370 = vsub.s32 %v2367, %v2369
      %v2371 = vrot.slane %v2355, %v2370
      %v2373 = vunpack.c.l.s4 1966171168
      %v2374 = vunpack.c.0.s8 %v2373
      %v2375 = vlaneseq
      %v2376 = vshrl.u32 %v2375, 7
      %v2377 = vsub.s32 %v2374, %v2376
      %v2378 = vrot.slane %v2356, %v2377
      %v2380 = vunpack.c.l.s4 1966171168
      %v2381 = vunpack.c.0.s8 %v2380
      %v2382 = vlaneseq
      %v2383 = vshrl.u32 %v2382, 7
      %v2384 = vsub.s32 %v2381, %v2383
      %v2385 = vrot.slane %v2357, %v2384
      %v2386 = vcombine.low %v2364, %v2371
      %v2387 = vcombine.low %v2378, %v2385
      %v2389 = vunpack.c.l.s4 1966171168
      %v2390 = vunpack.c.0.s8 %v2389
      %v2391 = vlaneseq
      %v2392 = vshrl.u32 %v2391, 7
      %v2393 = vsub.s32 %v2390, %v2392
      %v2394 = vrot.slane %v2386, %v2393
      %v2396 = vunpack.c.l.s4 1966171168
      %v2397 = vunpack.c.0.s8 %v2396
      %v2398 = vlaneseq
      %v2399 = vshrl.u32 %v2398, 7
      %v2400 = vsub.s32 %v2397, %v2399
      %v2401 = vrot.slane %v2387, %v2400
      %v2402 = vcombine.low %v2394, %v2401
      %v2403 = vcombine.low %v1104, %v1118
      %v2404 = vcombine.low %v1120, %v1145
      %v2405 = vcombine.low %v1159, %v1167
      %v2406 = vcombine.low %v1169, %v1152
      %v2408 = vunpack.c.l.s4 1966171168
      %v2409 = vunpack.c.0.s8 %v2408
      %v2410 = vlaneseq
      %v2411 = vshrl.u32 %v2410, 7
      %v2412 = vsub.s32 %v2409, %v2411
      %v2413 = vrot.slane %v2403, %v2412
      %v2415 = vunpack.c.l.s4 1966171168
      %v2416 = vunpack.c.0.s8 %v2415
      %v2417 = vlaneseq
      %v2418 = vshrl.u32 %v2417, 7
      %v2419 = vsub.s32 %v2416, %v2418
      %v2420 = vrot.slane %v2404, %v2419
      %v2422 = vunpack.c.l.s4 1966171168
      %v2423 = vunpack.c.0.s8 %v2422
      %v2424 = vlaneseq
      %v2425 = vshrl.u32 %v2424, 7
      %v2426 = vsub.s32 %v2423, %v2425
      %v2427 = vrot.slane %v2405, %v2426
      %v2429 = vunpack.c.l.s4 1966171168
      %v2430 = vunpack.c.0.s8 %v2429
      %v2431 = vlaneseq
      %v2432 = vshrl.u32 %v2431, 7
      %v2433 = vsub.s32 %v2430, %v2432
      %v2434 = vrot.slane %v2406, %v2433
      %v2435 = vcombine.low %v2413, %v2420
      %v2436 = vcombine.low %v2427, %v2434
      %v2438 = vunpack.c.l.s4 1966171168
      %v2439 = vunpack.c.0.s8 %v2438
      %v2440 = vlaneseq
      %v2441 = vshrl.u32 %v2440, 7
      %v2442 = vsub.s32 %v2439, %v2441
      %v2443 = vrot.slane %v2435, %v2442
      %v2445 = vunpack.c.l.s4 1966171168
      %v2446 = vunpack.c.0.s8 %v2445
      %v2447 = vlaneseq
      %v2448 = vshrl.u32 %v2447, 7
      %v2449 = vsub.s32 %v2446, %v2448
      %v2450 = vrot.slane %v2436, %v2449
      %v2451 = vcombine.low %v2443, %v2450
      %v2452 = vcombine.low %v1166, %v1168
      %v2453 = vcombine.low %v1193, %v1207
      %v2454 = vcombine.low %v1215, %v1217
      %v2455 = vcombine.low %v1200, %v1214
      %v2457 = vunpack.c.l.s4 1966171168
      %v2458 = vunpack.c.0.s8 %v2457
      %v2459 = vlaneseq
      %v2460 = vshrl.u32 %v2459, 7
      %v2461 = vsub.s32 %v2458, %v2460
      %v2462 = vrot.slane %v2452, %v2461
      %v2464 = vunpack.c.l.s4 1966171168
      %v2465 = vunpack.c.0.s8 %v2464
      %v2466 = vlaneseq
      %v2467 = vshrl.u32 %v2466, 7
      %v2468 = vsub.s32 %v2465, %v2467
      %v2469 = vrot.slane %v2453, %v2468
      %v2471 = vunpack.c.l.s4 1966171168
      %v2472 = vunpack.c.0.s8 %v2471
      %v2473 = vlaneseq
      %v2474 = vshrl.u32 %v2473, 7
      %v2475 = vsub.s32 %v2472, %v2474
      %v2476 = vrot.slane %v2454, %v2475
      %v2478 = vunpack.c.l.s4 1966171168
      %v2479 = vunpack.c.0.s8 %v2478
      %v2480 = vlaneseq
      %v2481 = vshrl.u32 %v2480, 7
      %v2482 = vsub.s32 %v2479, %v2481
      %v2483 = vrot.slane %v2455, %v2482
      %v2484 = vcombine.low %v2462, %v2469
      %v2485 = vcombine.low %v2476, %v2483
      %v2487 = vunpack.c.l.s4 1966171168
      %v2488 = vunpack.c.0.s8 %v2487
      %v2489 = vlaneseq
      %v2490 = vshrl.u32 %v2489, 7
      %v2491 = vsub.s32 %v2488, %v2490
      %v2492 = vrot.slane %v2484, %v2491
      %v2494 = vunpack.c.l.s4 1966171168
      %v2495 = vunpack.c.0.s8 %v2494
      %v2496 = vlaneseq
      %v2497 = vshrl.u32 %v2496, 7
      %v2498 = vsub.s32 %v2495, %v2497
      %v2499 = vrot.slane %v2485, %v2498
      %v2500 = vcombine.low %v2492, %v2499
      %v2502 = vunpack.c.l.s4 1966171168
      %v2503 = vunpack.c.0.s8 %v2502
      %v2504 = vlaneseq
      %v2505 = vshrl.u32 %v2504, 7
      %v2506 = vsub.s32 %v2503, %v2505
      %v2507 = vrot.slane %v1216, %v2506
      %v2509 = vunpack.c.l.s4 1966171168
      %v2510 = vunpack.c.0.s8 %v2509
      %v2511 = vlaneseq
      %v2512 = vshrl.u32 %v2511, 7
      %v2513 = vsub.s32 %v2510, %v2512
      %v2514 = vrot.slane %v2507, %v2513
      %v2515 = vsel %vm297, %v2255, 0
      %v2517 = vsel %vm297, %v2304, 0
      %v2519 = vsel %vm297, %v2353, 0
      %v2521 = vsel %vm297, %v2402, 0
      %v2523 = vsel %vm297, %v2451, 0
      %v2525 = vsel %vm297, %v2500, 0
      %v2527 = vsel %vm297, %v2514, 0
      %v2529 = vsel %vm394, %v1779, 0
      %2531 = vmatprep.subr.mxu0 0.0
      %2532 = vmatpush1.msra.mxu0 0.0
      %2533 = vmatprep.subr.mxu0 0.0
      %2534 = vmatpush1.msra.mxu0 0.0
      %2535 = vmatprep.subr.mxu0 0.0
      %2536 = vmatpush1.msra.mxu0 0.0
      %2537 = vmatprep.subr.mxu0 0.0
      %2538 = vmatpush1.msra.mxu0 0.0
      %2539 = vmatprep.subr.mxu0 0.0
      %2540 = vmatpush1.msra.mxu0 0.0
      %2541 = vmatprep.subr.mxu0 0.0
      %2542 = vmatpush1.msra.mxu0 0.0
      %2543 = vmatprep.subr.mxu0 0.0
      %2544 = vmatpush1.msra.mxu0 0.0
      %2545 = vmatprep.subr.mxu0 0.0
      %2546 = vmatpush1.msra.mxu0 0.0
      %2547 = vmatprep.subr.mxu0 0.0
      %2548 = vmatpush1.msra.mxu0 0.0
      %2549 = vmatprep.subr.mxu0 0.0
      %2550 = vmatpush1.msra.mxu0 0.0
      %2551 = vmatprep.subr.mxu0 0.0
      %2552 = vmatpush1.msra.mxu0 0.0
      %2553 = vmatprep.subr.mxu0 0.0
      %2554 = vmatpush1.msra.mxu0 0.0
      %2555 = vmatprep.subr.mxu0 0.0
      %2556 = vmatpush1.msra.mxu0 0.0
      %2557 = vmatprep.subr.mxu0 0.0
      %2558 = vmatpush1.msra.mxu0 0.0
      %2559 = vmatprep.subr.mxu0 0.0
      %2560 = vmatpush1.msra.mxu0 0.0
      %2561 = vmatprep.subr.mxu0 0.0
      %2562 = vmatpush1.msra.mxu0 %v2529
      %2563 = vmatprep.subr.mxu0 0.0
      %2564 = vmatpush2.msra.mxu0 0.0
      %2565 = vmatprep.subr.mxu0 0.0
      %2566 = vmatpush2.msra.mxu0 0.0
      %2567 = vmatprep.subr.mxu0 0.0
      %2568 = vmatpush2.msra.mxu0 0.0
      %2569 = vmatprep.subr.mxu0 0.0
      %2570 = vmatpush2.msra.mxu0 0.0
      %2571 = vmatprep.subr.mxu0 0.0
      %2572 = vmatpush2.msra.mxu0 0.0
      %2573 = vmatprep.subr.mxu0 0.0
      %2574 = vmatpush2.msra.mxu0 0.0
      %2575 = vmatprep.subr.mxu0 0.0
      %2576 = vmatpush2.msra.mxu0 0.0
      %2577 = vmatprep.subr.mxu0 0.0
      %2578 = vmatpush2.msra.mxu0 0.0
      %2579 = vmatprep.subr.mxu0 0.0
      %2580 = vmatpush2.msra.mxu0 0.0
      %2581 = vmatprep.subr.mxu0 0.0
      %2582 = vmatpush2.msra.mxu0 0.0
      %2583 = vmatprep.subr.mxu0 0.0
      %2584 = vmatpush2.msra.mxu0 0.0
      %2585 = vmatprep.subr.mxu0 0.0
      %2586 = vmatpush2.msra.mxu0 0.0
      %2587 = vmatprep.subr.mxu0 0.0
      %2588 = vmatpush2.msra.mxu0 0.0
      %2589 = vmatprep.subr.mxu0 0.0
      %2590 = vmatpush2.msra.mxu0 0.0
      %2591 = vmatprep.subr.mxu0 0.0
      %2592 = vmatpush2.msra.mxu0 0.0
      %2593 = vmatprep.subr.mxu0 0.0
      %2594 = vmatpush2.msra.mxu0 0.0
      %2595 = vmatprep.mubr.f32.mxu0 0.0
      %2596 = vmatmul.mubr.f32.gmra.mxu0 %v2515
      %v2597 = vpop.f32.mrf.mxu0
      %v2598 = vadd.f32 %v2174, %v2597
      %v2599 = vpop.f32.mrf.mxu0
      %2600 = vmatprep.mubr.f32.mxu0 0.0
      %2601 = vmatmul.mubr.f32.gmra.mxu0 %v2517
      %v2602 = vpop.f32.mrf.mxu0
      %v2603 = vadd.f32 %v2179, %v2602
      %v2604 = vpop.f32.mrf.mxu0
      %2605 = vmatprep.mubr.f32.mxu0 0.0
      %2606 = vmatmul.mubr.f32.gmra.mxu0 %v2519
      %v2607 = vpop.f32.mrf.mxu0
      %v2608 = vadd.f32 %v2184, %v2607
      %v2609 = vpop.f32.mrf.mxu0
      %2610 = vmatprep.mubr.f32.mxu0 0.0
      %2611 = vmatmul.mubr.f32.gmra.mxu0 %v2521
      %v2612 = vpop.f32.mrf.mxu0
      %v2613 = vadd.f32 %v2189, %v2612
      %v2614 = vpop.f32.mrf.mxu0
      %2615 = vmatprep.mubr.f32.mxu0 0.0
      %2616 = vmatmul.mubr.f32.gmra.mxu0 %v2523
      %v2617 = vpop.f32.mrf.mxu0
      %v2618 = vadd.f32 %v2194, %v2617
      %v2619 = vpop.f32.mrf.mxu0
      %2620 = vmatprep.mubr.f32.mxu0 0.0
      %2621 = vmatmul.mubr.f32.gmra.mxu0 %v2525
      %v2622 = vpop.f32.mrf.mxu0
      %v2623 = vadd.f32 %v2199, %v2622
      %v2624 = vpop.f32.mrf.mxu0
      %2625 = vmatprep.mubr.f32.mxu0 0.0
      %2626 = vmatmul.mubr.f32.gmra.mxu0 %v2527
      %v2627 = vpop.f32.mrf.mxu0
      %v2628 = vadd.f32 %v2204, %v2627
      %v2629 = vpop.f32.mrf.mxu0
      %2630 = vdwg.mxu0
      %v2632 = vlaneseq
      %v2633 = vshrl.u32 %v2632, 7
      %v2634 = vsub.s32 0, %v2633
      %v2635 = vrot.slane %v1780, %v2634
      %v2637 = vadd.f32 %v2598, %v2635
      %v2638 = vadd.f32 %v2603, %v2635
      %v2639 = vadd.f32 %v2608, %v2635
      %v2640 = vadd.f32 %v2613, %v2635
      %v2641 = vadd.f32 %v2618, %v2635
      %v2642 = vadd.f32 %v2623, %v2635
      %v2643 = vadd.f32 %v2628, %v2635
      %v2644 = vmax.f32 %v2637, 0.0
      %v2645 = vmax.f32 %v2638, 0.0
      %v2646 = vmax.f32 %v2639, 0.0
      %v2647 = vmax.f32 %v2640, 0.0
      %v2648 = vmax.f32 %v2641, 0.0
      %v2649 = vmax.f32 %v2642, 0.0
      %v2650 = vmax.f32 %v2643, 0.0
      %vm2651 = vcmask 64512
      %2652 = vst.msk [vmem:[%s256] sm:$0xff] %vm2651, %v2644
      %2653 = vst.msk [vmem:[%s256 + $0x8] sm:$0xff] %vm2651, %v2645
      %2654 = vst.msk [vmem:[%s256 + $0x10] sm:$0xff] %vm2651, %v2646
      %2655 = vst.msk [vmem:[%s256 + $0x18] sm:$0xff] %vm2651, %v2647
      %2656 = vst.msk [vmem:[%s256 + $0x20] sm:$0xff] %vm2651, %v2648
      %2657 = vst.msk [vmem:[%s256 + $0x28] sm:$0xff] %vm2651, %v2649
      %vm2658 = vcmask 57344
      %2659 = vst.msk [vmem:[%s256 + $0x30] sm:$0x1] %vm2658, %v2650
      %p2660 = scmp.lt.s32.totalorder %s17, 1
      %s2661 = scalar_select %p2660, %s17, 1
      %s2662 = smul.addr %s2661, 7
      %s2663 = smul.addr %s2662, 8
      %s2664 = scalar_lea.vmem %s6, %s2663
      // Predicated region
      $region45: #{tpu_custom_call.1} parent=43 // pred_check
        %p2665 = pneg %p166
      $region46: #{tpu_custom_call.1} parent=43 // pred_check_branch
        %2667 = sbr.rel (%p2665) target = $region48
      $region47: #{tpu_custom_call.1} parent=43 // pred_region
        _
      $region48: #{tpu_custom_call.1} parent=43 // pred_fallthru
        _
    $region44: #{tpu_custom_call.1} parent=5 // pred_fallthru
      _
    %p2668 = scmp.le.s32.totalorder 2, %s12
    // Predicated region
    $region49: #{tpu_custom_call.1} parent=5 // pred_check
      %p2669 = pneg %p2668
    $region50: #{tpu_custom_call.1} parent=5 // pred_check_branch
      %2671 = sbr.rel (%p2669) target = $region52
    $region51: #{tpu_custom_call.1} parent=5 // pred_region
      %s2672 = ssub.s32 %s12, 2
      // Predicated region
      $region53: #{tpu_custom_call.1} parent=51 // pred_check
        %p2673 = pneg %p172
      $region54: #{tpu_custom_call.1} parent=51 // pred_check_branch
        %2675 = sbr.rel (%p2673) target = $region56
      $region55: #{tpu_custom_call.1} parent=51 // pred_region
        %p2676 = scmp.lt.s32.totalorder %s18, 1
        %s2677 = scalar_select %p2676, %s18, 1
        %s2678 = smul.addr %s2677, 7
        %s2679 = smul.addr %s2678, 8
        %s2680 = scalar_lea.vmem %s6, %s2679
      $region56: #{tpu_custom_call.1} parent=51 // pred_fallthru
        _
    $region52: #{tpu_custom_call.1} parent=5 // pred_fallthru
      _
  $region6: #{tpu_custom_call.1} parent=0 // loop_footer
    %s16 = sadd.s32 1, %s12
  $region7: #{tpu_custom_call.1} parent=0 // loop_footer_branch
    %11 = sbr.rel target = $region3
  $region8: #{tpu_custom_call.1} parent=0 // loop_exit
    _

</llo_original>
